<compile_context>
chip_gen: v7x
topology: tpu7x:2x2x1
jax: 0.10.0
libtpu: 0.0.40
codegen_flags: <defaults>
</compile_context>

<pallas_src>
import numpy as np
import jax
import jax.numpy as jnp
from jax.experimental import pallas as pl
from jax.experimental.pallas import tpu as pltpu

# ---------------- configuration (small, consistent with the module) -----------
B = 2            # batch
S = 32           # sequence length (stand-in for max_length)
HID = 128        # hid_dim (Conv1d in_channels, linear out_features)
N_LAST = 2       # n_last_hidden -> linear in_features = HID * N_LAST
FILTER_SIZES = (3, 4, 5)
NUM_FILTERS = (100, 100, 100)
N_ARTICLE = 10   # len(maps['article2idx'])
N_CHARGE = 12    # len(maps['charge2idx'])
SUM_FILTERS = int(np.sum(NUM_FILTERS))

KMAX = max(FILTER_SIZES)              # 5 taps (smaller kernels zero-padded)
NBR = len(FILTER_SIZES)               # 3 conv branches
OC_PAD = 128                          # per-branch channels padded 100 -> 128
OC_TOT = OC_PAD * NBR                 # 384 = 3 * 128 (lane-dense)
HEAD_PAD = 128                        # article+charge logits padded to one lane tile

assert S >= KMAX, "sequence length must be >= the largest conv kernel size"
assert max(NUM_FILTERS) <= OC_PAD
assert N_ARTICLE + N_CHARGE <= HEAD_PAD


# ---------------------------- Pallas kernel ----------------------------------
def el_cnn_kernel(hid_ref, wlin_ref, blin_ref, wconv_ref, bconv_ref,
                  whead_ref, bhead_ref, mask_ref, out_ref, im2col_ref):
    """Whole forward head; VMEM-resident, lane-dense, im2col conv."""
    b, s, h2 = hid_ref.shape
    rows = b * s

    # --- self.linear : one batch-fused (B*S, 2H) x (2H, H) matmul -------------
    x2 = hid_ref[...].reshape(rows, h2)                       # layout-free merge
    h = jnp.dot(x2, wlin_ref[...],
                preferred_element_type=jnp.float32) + blin_ref[...]   # (B*S, H)

    # --- im2col staging in VMEM scratch ---------------------------------------
    # Column block j holds h shifted up by j rows: row t sees h[t + j].
    # (Wrap / cross-batch rows are invalid but land only at positions
    #  t > S - k_g, which the mask zeroes below.)
    im2col_ref[:, 0:HID] = h
    for j in range(1, KMAX):
        im2col_ref[:, j * HID:(j + 1) * HID] = pltpu.roll(h, rows - j, 0)

    # --- fused Conv1d(k=3,4,5): ONE (B*S, 640) x (640, 384) matmul ------------
    acc = jnp.dot(im2col_ref[...], wconv_ref[...],
                  preferred_element_type=jnp.float32) + bconv_ref[...]
    acc = jnp.maximum(acc, 0.0)                               # ReLU (>= 0)

    # --- precomputed tail-validity mask, then max-pool over time --------------
    acc = acc.reshape(b, s, OC_TOT) * mask_ref[...]           # mask is (S, 384)
    pooled = jnp.max(acc, axis=1)                             # (B, 384)

    # --- both classifier heads fused: one lane-dense (B,384)x(384,128) matmul -
    out_ref[...] = (jnp.dot(pooled, whead_ref[...],
                            preferred_element_type=jnp.float32) + bhead_ref[...])


# ---------------- one-time host-side (numpy) weight repacking -----------------
def prep_params(params):
    """Fuse + zero-pad all weights into lane-dense slabs. Call ONCE at init."""
    (wlin, blin, w3, b3, w4, b4, w5, b5, wart, bart, wchg, bchg) = [
        np.asarray(p, np.float32) for p in params]

    # Conv weights (k, H, O) -> im2col slab (KMAX*H, 3*128), zero-padded taps/channels.
    wconv = np.zeros((KMAX, HID, OC_TOT), np.float32)
    bconv = np.zeros((1, OC_TOT), np.float32)
    for g, (wk, bk) in enumerate(((w3, b3), (w4, b4), (w5, b5))):
        k = wk.shape[0]
        oc = wk.shape[2]
        wconv[:k, :, g * OC_PAD:g * OC_PAD + oc] = wk
        bconv[:, g * OC_PAD:g * OC_PAD + oc] = bk
    wconv_im2col = wconv.reshape(KMAX * HID, OC_TOT)          # rows j*H + h

    # fc_article / fc_charge fused into one (384, 128) padded head.
    whead = np.zeros((OC_TOT, HEAD_PAD), np.float32)
    bhead = np.zeros((1, HEAD_PAD), np.float32)
    offs = np.concatenate([[0], np.cumsum(NUM_FILTERS)]).astype(int)
    for g in range(NBR):
        oc = NUM_FILTERS[g]
        whead[g * OC_PAD:g * OC_PAD + oc, 0:N_ARTICLE] = wart[offs[g]:offs[g] + oc, :]
        whead[g * OC_PAD:g * OC_PAD + oc,
              N_ARTICLE:N_ARTICLE + N_CHARGE] = wchg[offs[g]:offs[g] + oc, :]
    bhead[:, 0:N_ARTICLE] = bart
    bhead[:, N_ARTICLE:N_ARTICLE + N_CHARGE] = bchg

    # Tail-validity mask: position t of branch g is valid iff t <= S - FILTER_SIZES[g].
    mask = np.zeros((S, OC_TOT), np.float32)
    for g, k in enumerate(FILTER_SIZES):
        mask[0:S - k + 1, g * OC_PAD:(g + 1) * OC_PAD] = 1.0

    return tuple(jnp.asarray(a) for a in
                 (wlin, blin, wconv_im2col, bconv, whead, bhead, mask))


# ------------------------------ forward ---------------------------------------
@jax.jit
def el_cnn_forward(hidden_cat, packed):
    """hidden_cat: (B, S, 2*HID) f32 — stands in for cat(outputs[1][-2:], -1)."""
    wlin, blin, wconv, bconv, whead, bhead, mask = packed
    b, s, _ = hidden_cat.shape
    vmem = pl.BlockSpec(memory_space=pltpu.MemorySpace.VMEM)
    out = pl.pallas_call(
        el_cnn_kernel,
        out_shape=jax.ShapeDtypeStruct((b, HEAD_PAD), jnp.float32),
        in_specs=[vmem] * 8,
        out_specs=vmem,
        scratch_shapes=[pltpu.VMEM((b * s, KMAX * HID), jnp.float32)],
    )(hidden_cat, wlin, blin, wconv, bconv, whead, bhead, mask)
    return {'article': out[:, :N_ARTICLE],
            'charge': out[:, N_ARTICLE:N_ARTICLE + N_CHARGE]}


# ------------------------- pure-JAX reference --------------------------------
def ref_forward(hidden_cat, params):
    (wlin, blin, w3, b3, w4, b4, w5, b5, wart, bart, wchg, bchg) = params
    h = hidden_cat @ wlin + blin                              # (B, S, H)
    pooled = []
    for wk, bk in ((w3, b3), (w4, b4), (w5, b5)):
        k = wk.shape[0]
        length = h.shape[1] - k + 1
        acc = jnp.zeros((h.shape[0], length, wk.shape[2]), jnp.float32)
        for j in range(k):
            acc = acc + jnp.einsum('bsh,ho->bso', h[:, j:j + length, :], wk[j])
        acc = jax.nn.relu(acc + bk)
        pooled.append(jnp.max(acc, axis=1))
    x = jnp.concatenate(pooled, axis=1)
    return {'article': x @ wart + bart, 'charge': x @ wchg + bchg}


# ------------------------------- main -----------------------------------------
if __name__ == "__main__":
    key = jax.random.PRNGKey(0)
    ks = jax.random.split(key, 16)
    scale = 0.02

    # Synthetic ELECTRA hidden states (concat of last 2 layers), float32.
    hidden_cat = jax.random.normal(ks[0], (B, S, HID * N_LAST), jnp.float32)

    # Deterministic synthetic parameters (shapes per El_CNN.__init__).
    wlin = scale * jax.random.normal(ks[1], (HID * N_LAST, HID), jnp.float32)   # Linear(2H->H)
    blin = scale * jax.random.normal(ks[2], (1, HID), jnp.float32)

    # Conv1d weights: PyTorch layout (O, H, k) -> (k, H, O).
    def conv_w(k_, rng):
        w = scale * jax.random.normal(rng, (NUM_FILTERS[0], HID, k_), jnp.float32)
        return jnp.transpose(w, (2, 1, 0))                                      # (k, H, O)

    w3 = conv_w(3, ks[3]); b3 = scale * jax.random.normal(ks[4], (1, NUM_FILTERS[0]), jnp.float32)
    w4 = conv_w(4, ks[5]); b4 = scale * jax.random.normal(ks[6], (1, NUM_FILTERS[1]), jnp.float32)
    w5 = conv_w(5, ks[7]); b5 = scale * jax.random.normal(ks[8], (1, NUM_FILTERS[2]), jnp.float32)

    wart = scale * jax.random.normal(ks[9], (SUM_FILTERS, N_ARTICLE), jnp.float32)
    bart = scale * jax.random.normal(ks[10], (1, N_ARTICLE), jnp.float32)
    wchg = scale * jax.random.normal(ks[11], (SUM_FILTERS, N_CHARGE), jnp.float32)
    bchg = scale * jax.random.normal(ks[12], (1, N_CHARGE), jnp.float32)

    params = (wlin, blin, w3, b3, w4, b4, w5, b5, wart, bart, wchg, bchg)

    # One-time weight packing (hoisted out of the call path per perf review).
    packed = prep_params(params)

    out = el_cnn_forward(hidden_cat, packed)
    jax.block_until_ready(out)

    ref = ref_forward(hidden_cat, params)
    np.testing.assert_allclose(np.asarray(out['article']), np.asarray(ref['article']),
                               rtol=1e-4, atol=1e-4)
    np.testing.assert_allclose(np.asarray(out['charge']), np.asarray(ref['charge']),
                               rtol=1e-4, atol=1e-4)
    print("KERNEL_OK")
</pallas_src>

<mosaic_0001>
module attributes {stable_mosaic.version = 11 : i64} {
  func.func @el_cnn_kernel(%arg0: memref<2x32x256xf32, #tpu.memory_space<vmem>>, %arg1: memref<256x128xf32, #tpu.memory_space<vmem>>, %arg2: memref<1x128xf32, #tpu.memory_space<vmem>>, %arg3: memref<640x384xf32, #tpu.memory_space<vmem>>, %arg4: memref<1x384xf32, #tpu.memory_space<vmem>>, %arg5: memref<384x128xf32, #tpu.memory_space<vmem>>, %arg6: memref<1x128xf32, #tpu.memory_space<vmem>>, %arg7: memref<32x384xf32, #tpu.memory_space<vmem>>, %arg8: memref<2x128xf32, #tpu.memory_space<vmem>>, %arg9: memref<64x640xf32, #tpu.memory_space<vmem>>) attributes {dimension_semantics = [], scalar_prefetch = 0 : i64, scratch_operands = 1 : i64, tpu.core_type = #tpu.core_type<tc>} {
    %c0 = arith.constant 0 : index
    %c0_0 = arith.constant 0 : index
    %c0_1 = arith.constant 0 : index
    %0 = vector.load %arg0[%c0, %c0_0, %c0_1] : memref<2x32x256xf32, #tpu.memory_space<vmem>>, vector<2x32x256xf32>
    %1 = vector.shape_cast %0 : vector<2x32x256xf32> to vector<64x256xf32>
    %c0_2 = arith.constant 0 : index
    %c0_3 = arith.constant 0 : index
    %2 = vector.load %arg1[%c0_2, %c0_3] : memref<256x128xf32, #tpu.memory_space<vmem>>, vector<256x128xf32>
    %cst = arith.constant dense<0.000000e+00> : vector<64x128xf32>
    %3 = tpu.matmul %1, %2, %cst {dimension_numbers = #tpu.dot_dimension_numbers<[1], [0], [0], [1], [0, 0, 1, 1], [], []>} : vector<64x256xf32>, vector<256x128xf32>, vector<64x128xf32> -> vector<64x128xf32>
    %c0_4 = arith.constant 0 : index
    %c0_5 = arith.constant 0 : index
    %4 = vector.load %arg2[%c0_4, %c0_5] : memref<1x128xf32, #tpu.memory_space<vmem>>, vector<1x128xf32>
    %5 = vector.broadcast %4 : vector<1x128xf32> to vector<64x128xf32>
    %6 = arith.addf %3, %5 : vector<64x128xf32>
    %c0_6 = arith.constant 0 : index
    %c0_7 = arith.constant 0 : index
    %7 = vector.load %arg9[%c0_6, %c0_7] : memref<64x640xf32, #tpu.memory_space<vmem>>, vector<64x128xf32>
    tpu.vector_store %arg9[%c0_6, %c0_7], %6 {strides = array<i32>} : memref<64x640xf32, #tpu.memory_space<vmem>>, vector<64x128xf32>,
    %c63_i32 = arith.constant 63 : i32
    %8 = tpu.dynamic_rotate %6 by %c63_i32 dim 0 : vector<64x128xf32>, i32 -> vector<64x128xf32>
    %c0_8 = arith.constant 0 : index
    %c128 = arith.constant 128 : index
    %9 = vector.load %arg9[%c0_8, %c128] : memref<64x640xf32, #tpu.memory_space<vmem>>, vector<64x128xf32>
    tpu.vector_store %arg9[%c0_8, %c128], %8 {strides = array<i32>} : memref<64x640xf32, #tpu.memory_space<vmem>>, vector<64x128xf32>,
    %c62_i32 = arith.constant 62 : i32
    %10 = tpu.dynamic_rotate %6 by %c62_i32 dim 0 : vector<64x128xf32>, i32 -> vector<64x128xf32>
    %c0_9 = arith.constant 0 : index
    %c256 = arith.constant 256 : index
    %11 = vector.load %arg9[%c0_9, %c256] : memref<64x640xf32, #tpu.memory_space<vmem>>, vector<64x128xf32>
    tpu.vector_store %arg9[%c0_9, %c256], %10 {strides = array<i32>} : memref<64x640xf32, #tpu.memory_space<vmem>>, vector<64x128xf32>,
    %c61_i32 = arith.constant 61 : i32
    %12 = tpu.dynamic_rotate %6 by %c61_i32 dim 0 : vector<64x128xf32>, i32 -> vector<64x128xf32>
    %c0_10 = arith.constant 0 : index
    %c384 = arith.constant 384 : index
    %13 = vector.load %arg9[%c0_10, %c384] : memref<64x640xf32, #tpu.memory_space<vmem>>, vector<64x128xf32>
    tpu.vector_store %arg9[%c0_10, %c384], %12 {strides = array<i32>} : memref<64x640xf32, #tpu.memory_space<vmem>>, vector<64x128xf32>,
    %c60_i32 = arith.constant 60 : i32
    %14 = tpu.dynamic_rotate %6 by %c60_i32 dim 0 : vector<64x128xf32>, i32 -> vector<64x128xf32>
    %c0_11 = arith.constant 0 : index
    %c512 = arith.constant 512 : index
    %15 = vector.load %arg9[%c0_11, %c512] : memref<64x640xf32, #tpu.memory_space<vmem>>, vector<64x128xf32>
    tpu.vector_store %arg9[%c0_11, %c512], %14 {strides = array<i32>} : memref<64x640xf32, #tpu.memory_space<vmem>>, vector<64x128xf32>,
    %c0_12 = arith.constant 0 : index
    %c0_13 = arith.constant 0 : index
    %16 = vector.load %arg9[%c0_12, %c0_13] : memref<64x640xf32, #tpu.memory_space<vmem>>, vector<64x640xf32>
    %c0_14 = arith.constant 0 : index
    %c0_15 = arith.constant 0 : index
    %17 = vector.load %arg3[%c0_14, %c0_15] : memref<640x384xf32, #tpu.memory_space<vmem>>, vector<640x384xf32>
    %cst_16 = arith.constant dense<0.000000e+00> : vector<64x384xf32>
    %18 = tpu.matmul %16, %17, %cst_16 {dimension_numbers = #tpu.dot_dimension_numbers<[1], [0], [0], [1], [0, 0, 1, 1], [], []>} : vector<64x640xf32>, vector<640x384xf32>, vector<64x384xf32> -> vector<64x384xf32>
    %c0_17 = arith.constant 0 : index
    %c0_18 = arith.constant 0 : index
    %19 = vector.load %arg4[%c0_17, %c0_18] : memref<1x384xf32, #tpu.memory_space<vmem>>, vector<1x384xf32>
    %20 = vector.broadcast %19 : vector<1x384xf32> to vector<64x384xf32>
    %21 = arith.addf %18, %20 : vector<64x384xf32>
    %cst_19 = arith.constant 0.000000e+00 : f32
    %22 = vector.broadcast %cst_19 : f32 to vector<64x384xf32>
    %23 = arith.maximumf %21, %22 : vector<64x384xf32>
    %24 = vector.shape_cast %23 : vector<64x384xf32> to vector<2x32x384xf32>
    %c0_20 = arith.constant 0 : index
    %c0_21 = arith.constant 0 : index
    %25 = vector.load %arg7[%c0_20, %c0_21] : memref<32x384xf32, #tpu.memory_space<vmem>>, vector<32x384xf32>
    %26 = vector.shape_cast %25 : vector<32x384xf32> to vector<1x32x384xf32>
    %27 = vector.broadcast %26 : vector<1x32x384xf32> to vector<2x32x384xf32>
    %28 = arith.mulf %24, %27 : vector<2x32x384xf32>
    %cst_22 = arith.constant dense<0xFF800000> : vector<2x384xf32>
    %29 = vector.multi_reduction <maximumf>, %28, %cst_22 [1] : vector<2x32x384xf32> to vector<2x384xf32>
    %c0_23 = arith.constant 0 : index
    %c0_24 = arith.constant 0 : index
    %30 = vector.load %arg5[%c0_23, %c0_24] : memref<384x128xf32, #tpu.memory_space<vmem>>, vector<384x128xf32>
    %cst_25 = arith.constant dense<0.000000e+00> : vector<2x128xf32>
    %31 = tpu.matmul %29, %30, %cst_25 {dimension_numbers = #tpu.dot_dimension_numbers<[1], [0], [0], [1], [0, 0, 1, 1], [], []>} : vector<2x384xf32>, vector<384x128xf32>, vector<2x128xf32> -> vector<2x128xf32>
    %c0_26 = arith.constant 0 : index
    %c0_27 = arith.constant 0 : index
    %32 = vector.load %arg6[%c0_26, %c0_27] : memref<1x128xf32, #tpu.memory_space<vmem>>, vector<1x128xf32>
    %33 = vector.broadcast %32 : vector<1x128xf32> to vector<2x128xf32>
    %34 = arith.addf %31, %33 : vector<2x128xf32>
    %c0_28 = arith.constant 0 : index
    %c0_29 = arith.constant 0 : index
    %35 = vector.load %arg8[%c0_28, %c0_29] : memref<2x128xf32, #tpu.memory_space<vmem>>, vector<2x128xf32>
    tpu.vector_store %arg8[%c0_28, %c0_29], %34 {strides = array<i32>} : memref<2x128xf32, #tpu.memory_space<vmem>>, vector<2x128xf32>,
    return
  }
}

</mosaic_0001>

<llo_original>
// kernel: el_cnn_forward.1
$region0: #{el_cnn_forward.1}
  #allocation0 [shape = 'u32[]', space=smem, size = 0x4, offset = 0x4, fixed_abs, tag = 'smem constant byte address 0x4 - core index']
  #allocation1 [shape = 'u32[144,128]{1,0:T(1,128)}', space=vmem, size = 0x12000, scoped, tag = 'internal scratch']
  #allocation2 [shape = 'f32[64,640]{1,0:T(8,128)}', space=vmem, size = 0x28000, scoped, tag = 'scratch operand']
  %s0 = inlined_call_operand.hbm [shape: f32[2,32,256], index: 0, kind: input, shape index: {}]
  %s1 = inlined_call_operand.hbm [shape: f32[256,128], index: 1, kind: input, shape index: {}]
  %s2 = inlined_call_operand.vmem [shape: f32[1,128], index: 2, kind: input, shape index: {}]
  %s3 = inlined_call_operand.hbm [shape: f32[640,384], index: 3, kind: input, shape index: {}]
  %s4 = inlined_call_operand.vmem [shape: f32[1,384], index: 4, kind: input, shape index: {}]
  %s5 = inlined_call_operand.hbm [shape: f32[384,128], index: 5, kind: input, shape index: {}]
  %s6 = inlined_call_operand.vmem [shape: f32[1,128], index: 6, kind: input, shape index: {}]
  %s7 = inlined_call_operand.hbm [shape: f32[32,384], index: 7, kind: input, shape index: {}]
  %s8 = inlined_call_operand.vmem [shape: f32[2,128], index: 8, kind: output, shape index: {}]
  %s9 = sld [smem:[#allocation0]]
  $region62: #{el_cnn_forward.1} parent=0
    _
  %s11 = ssub.s32 1, %s9
  %s12 = scalar_select 0, %s11, %s9
  $region1: #{el_cnn_forward.1} parent=0
    #allocation3 [shape = 'u8[65536]{0}', space=vmem, size = 0x10000, scoped, tag = 'input window, operand 0, single buffered']
    #allocation4 [shape = 's32[1]{0}', space=sflag, size = 0x4, scoped, tag = 'scoped memory for el_cnn_forward.1']
    #allocation5 [shape = 'u8[131072]{0}', space=vmem, size = 0x20000, scoped, tag = 'input window, operand 1, single buffered']
    #allocation6 [shape = 's32[1]{0}', space=sflag, size = 0x4, scoped, tag = 'scoped memory for el_cnn_forward.1']
    #allocation7 [shape = 'u8[983040]{0}', space=vmem, size = 0xf0000, scoped, tag = 'input window, operand 3, single buffered']
    #allocation8 [shape = 'u8[196608]{0}', space=vmem, size = 0x30000, scoped, tag = 'input window, operand 5, single buffered']
    #allocation9 [shape = 's32[1]{0}', space=sflag, size = 0x4, scoped, tag = 'scoped memory for el_cnn_forward.1']
    #allocation10 [shape = 'u8[49152]{0}', space=vmem, size = 0xc000, scoped, tag = 'input window, operand 7, single buffered']
    %13 = vsyncpa [#allocation4], 0
    %14 = vsyncpa [#allocation6], 0
    %15 = vsyncpa [#allocation9], 0
    // Predicated region
    $region2: #{el_cnn_forward.1} parent=1 // pred_check
      _
    $region3: #{el_cnn_forward.1} parent=1 // pred_check_branch
      %17 = sbr.rel (0) target = $region5
    $region4: #{el_cnn_forward.1} parent=1 // pred_region
      %s19 = ssub.s32 2048, 2048
      %20 = vsyncadd [#allocation4], %s19
      %s21 = sshll.u32 [#allocation3], 4
      %s22 = int_to_ptr.vmem [resolvable:$true] %s21
      %27 = dma.hbm_to_vmem [thread:$0]  %s0, 2048, %s22, [#allocation4], 256, 256, 16
    $region5: #{el_cnn_forward.1} parent=1 // pred_fallthru
      _
    // Predicated region
    $region6: #{el_cnn_forward.1} parent=1 // pred_check
      _
    $region7: #{el_cnn_forward.1} parent=1 // pred_check_branch
      %29 = sbr.rel (0) target = $region9
    $region8: #{el_cnn_forward.1} parent=1 // pred_region
      %s31 = ssub.s32 4096, 4096
      %32 = vsyncadd [#allocation6], %s31
      %s33 = sshll.u32 [#allocation5], 4
      %s34 = int_to_ptr.vmem [resolvable:$true] %s33
      %39 = dma.hbm_to_vmem [thread:$0]  %s1, 4096, %s34, [#allocation6], 128, 128, 8
    $region9: #{el_cnn_forward.1} parent=1 // pred_fallthru
      _
    // Predicated region
    $region10: #{el_cnn_forward.1} parent=1 // pred_check
      _
    $region11: #{el_cnn_forward.1} parent=1 // pred_check_branch
      %41 = sbr.rel (0) target = $region13
    $region12: #{el_cnn_forward.1} parent=1 // pred_region
      _
    $region13: #{el_cnn_forward.1} parent=1 // pred_fallthru
      _
    // Predicated region
    $region14: #{el_cnn_forward.1} parent=1 // pred_check
      _
    $region15: #{el_cnn_forward.1} parent=1 // pred_check_branch
      %43 = sbr.rel (0) target = $region17
    $region16: #{el_cnn_forward.1} parent=1 // pred_region
      %s45 = ssub.s32 30720, 30720
      %46 = vsyncadd [#allocation6], %s45
      %s47 = sshll.u32 [#allocation7], 4
      %s48 = int_to_ptr.vmem [resolvable:$true] %s47
      %53 = dma.hbm_to_vmem [thread:$0]  %s3, 30720, %s48, [#allocation6], 384, 384, 24
    $region17: #{el_cnn_forward.1} parent=1 // pred_fallthru
      _
    // Predicated region
    $region18: #{el_cnn_forward.1} parent=1 // pred_check
      _
    $region19: #{el_cnn_forward.1} parent=1 // pred_check_branch
      %55 = sbr.rel (0) target = $region21
    $region20: #{el_cnn_forward.1} parent=1 // pred_region
      _
    $region21: #{el_cnn_forward.1} parent=1 // pred_fallthru
      _
    // Predicated region
    $region22: #{el_cnn_forward.1} parent=1 // pred_check
      _
    $region23: #{el_cnn_forward.1} parent=1 // pred_check_branch
      %57 = sbr.rel (0) target = $region25
    $region24: #{el_cnn_forward.1} parent=1 // pred_region
      %s59 = ssub.s32 6144, 6144
      %60 = vsyncadd [#allocation9], %s59
      %s61 = sshll.u32 [#allocation8], 4
      %s62 = int_to_ptr.vmem [resolvable:$true] %s61
      %67 = dma.hbm_to_vmem [thread:$0]  %s5, 6144, %s62, [#allocation9], 128, 128, 8
    $region25: #{el_cnn_forward.1} parent=1 // pred_fallthru
      _
    // Predicated region
    $region26: #{el_cnn_forward.1} parent=1 // pred_check
      _
    $region27: #{el_cnn_forward.1} parent=1 // pred_check_branch
      %69 = sbr.rel (0) target = $region29
    $region28: #{el_cnn_forward.1} parent=1 // pred_region
      _
    $region29: #{el_cnn_forward.1} parent=1 // pred_fallthru
      _
    // Predicated region
    $region30: #{el_cnn_forward.1} parent=1 // pred_check
      _
    $region31: #{el_cnn_forward.1} parent=1 // pred_check_branch
      %71 = sbr.rel (0) target = $region33
    $region32: #{el_cnn_forward.1} parent=1 // pred_region
      %s73 = ssub.s32 1536, 1536
      %74 = vsyncadd [#allocation9], %s73
      %s75 = sshll.u32 [#allocation10], 4
      %s76 = int_to_ptr.vmem [resolvable:$true] %s75
      %81 = dma.hbm_to_vmem [thread:$0]  %s7, 1536, %s76, [#allocation9], 384, 384, 24
    $region33: #{el_cnn_forward.1} parent=1 // pred_fallthru
      _
    // Predicated region
    $region34: #{el_cnn_forward.1} parent=1 // pred_check
      _
    $region35: #{el_cnn_forward.1} parent=1 // pred_check_branch
      %83 = sbr.rel (0) target = $region37
    $region36: #{el_cnn_forward.1} parent=1 // pred_region
      %84 = dma.done [#allocation4], 2048
    $region37: #{el_cnn_forward.1} parent=1 // pred_fallthru
      _
    // Predicated region
    $region38: #{el_cnn_forward.1} parent=1 // pred_check
      _
    $region39: #{el_cnn_forward.1} parent=1 // pred_check_branch
      %86 = sbr.rel (0) target = $region41
    $region40: #{el_cnn_forward.1} parent=1 // pred_region
      %87 = dma.done [#allocation6], 4096
    $region41: #{el_cnn_forward.1} parent=1 // pred_fallthru
      _
    // Predicated region
    $region42: #{el_cnn_forward.1} parent=1 // pred_check
      _
    $region43: #{el_cnn_forward.1} parent=1 // pred_check_branch
      %89 = sbr.rel (0) target = $region45
    $region44: #{el_cnn_forward.1} parent=1 // pred_region
      %90 = dma.done [#allocation6], 30720
    $region45: #{el_cnn_forward.1} parent=1 // pred_fallthru
      _
    // Predicated region
    $region46: #{el_cnn_forward.1} parent=1 // pred_check
      _
    $region47: #{el_cnn_forward.1} parent=1 // pred_check_branch
      %92 = sbr.rel (0) target = $region49
    $region48: #{el_cnn_forward.1} parent=1 // pred_region
      %93 = dma.done [#allocation9], 6144
    $region49: #{el_cnn_forward.1} parent=1 // pred_fallthru
      _
    // Predicated region
    $region50: #{el_cnn_forward.1} parent=1 // pred_check
      _
    $region51: #{el_cnn_forward.1} parent=1 // pred_check_branch
      %95 = sbr.rel (0) target = $region53
    $region52: #{el_cnn_forward.1} parent=1 // pred_region
      %96 = dma.done [#allocation9], 1536
    $region53: #{el_cnn_forward.1} parent=1 // pred_fallthru
      _
    %v97 = vld [vmem:[#allocation3] sm:$0xff]
    %v98 = vld [vmem:[#allocation3 + $0x8] sm:$0xff]
    %v99 = vld [vmem:[#allocation3 + $0x10] sm:$0xff]
    %v100 = vld [vmem:[#allocation3 + $0x18] sm:$0xff]
    %v101 = vld [vmem:[#allocation3 + $0x20] sm:$0xff]
    %v102 = vld [vmem:[#allocation3 + $0x28] sm:$0xff]
    %v103 = vld [vmem:[#allocation3 + $0x30] sm:$0xff]
    %v104 = vld [vmem:[#allocation3 + $0x38] sm:$0xff]
    %v105 = vld [vmem:[#allocation3 + $0x40] sm:$0xff]
    %v106 = vld [vmem:[#allocation3 + $0x48] sm:$0xff]
    %v107 = vld [vmem:[#allocation3 + $0x50] sm:$0xff]
    %v108 = vld [vmem:[#allocation3 + $0x58] sm:$0xff]
    %v109 = vld [vmem:[#allocation3 + $0x60] sm:$0xff]
    %v110 = vld [vmem:[#allocation3 + $0x68] sm:$0xff]
    %v111 = vld [vmem:[#allocation3 + $0x70] sm:$0xff]
    %v112 = vld [vmem:[#allocation3 + $0x78] sm:$0xff]
    %v113 = vld [vmem:[#allocation5] sm:$0xff]
    %v114 = vld [vmem:[#allocation5 + $0x8] sm:$0xff]
    %v115 = vld [vmem:[#allocation5 + $0x10] sm:$0xff]
    %v116 = vld [vmem:[#allocation5 + $0x18] sm:$0xff]
    %v117 = vld [vmem:[#allocation5 + $0x20] sm:$0xff]
    %v118 = vld [vmem:[#allocation5 + $0x28] sm:$0xff]
    %v119 = vld [vmem:[#allocation5 + $0x30] sm:$0xff]
    %v120 = vld [vmem:[#allocation5 + $0x38] sm:$0xff]
    %v121 = vld [vmem:[#allocation5 + $0x40] sm:$0xff]
    %v122 = vld [vmem:[#allocation5 + $0x48] sm:$0xff]
    %v123 = vld [vmem:[#allocation5 + $0x50] sm:$0xff]
    %v124 = vld [vmem:[#allocation5 + $0x58] sm:$0xff]
    %v125 = vld [vmem:[#allocation5 + $0x60] sm:$0xff]
    %v126 = vld [vmem:[#allocation5 + $0x68] sm:$0xff]
    %v127 = vld [vmem:[#allocation5 + $0x70] sm:$0xff]
    %v128 = vld [vmem:[#allocation5 + $0x78] sm:$0xff]
    %v129 = vld [vmem:[#allocation5 + $0x80] sm:$0xff]
    %v130 = vld [vmem:[#allocation5 + $0x88] sm:$0xff]
    %v131 = vld [vmem:[#allocation5 + $0x90] sm:$0xff]
    %v132 = vld [vmem:[#allocation5 + $0x98] sm:$0xff]
    %v133 = vld [vmem:[#allocation5 + $0xa0] sm:$0xff]
    %v134 = vld [vmem:[#allocation5 + $0xa8] sm:$0xff]
    %v135 = vld [vmem:[#allocation5 + $0xb0] sm:$0xff]
    %v136 = vld [vmem:[#allocation5 + $0xb8] sm:$0xff]
    %v137 = vld [vmem:[#allocation5 + $0xc0] sm:$0xff]
    %v138 = vld [vmem:[#allocation5 + $0xc8] sm:$0xff]
    %v139 = vld [vmem:[#allocation5 + $0xd0] sm:$0xff]
    %v140 = vld [vmem:[#allocation5 + $0xd8] sm:$0xff]
    %v141 = vld [vmem:[#allocation5 + $0xe0] sm:$0xff]
    %v142 = vld [vmem:[#allocation5 + $0xe8] sm:$0xff]
    %v143 = vld [vmem:[#allocation5 + $0xf0] sm:$0xff]
    %v144 = vld [vmem:[#allocation5 + $0xf8] sm:$0xff]
    %v145 = vld [vmem:[%s2] sm:$0x1]
    %v147 = vlaneseq
    %v148 = vshrl.u32 %v147, 7
    %v149 = vsub.s32 0, %v148
    %v150 = vrot.slane %v145, %v149
    %152 = vmatprep.subr.mxu0 0.0
    %153 = vmatpush1.msra.mxu0 %v113
    %154 = vmatprep.subr.mxu0 0.0
    %155 = vmatpush1.msra.mxu0 %v114
    %156 = vmatprep.subr.mxu0 0.0
    %157 = vmatpush1.msra.mxu0 %v115
    %158 = vmatprep.subr.mxu0 0.0
    %159 = vmatpush1.msra.mxu0 %v116
    %160 = vmatprep.subr.mxu0 0.0
    %161 = vmatpush1.msra.mxu0 %v117
    %162 = vmatprep.subr.mxu0 0.0
    %163 = vmatpush1.msra.mxu0 %v118
    %164 = vmatprep.subr.mxu0 0.0
    %165 = vmatpush1.msra.mxu0 %v119
    %166 = vmatprep.subr.mxu0 0.0
    %167 = vmatpush1.msra.mxu0 %v120
    %168 = vmatprep.subr.mxu0 0.0
    %169 = vmatpush1.msra.mxu0 %v121
    %170 = vmatprep.subr.mxu0 0.0
    %171 = vmatpush1.msra.mxu0 %v122
    %172 = vmatprep.subr.mxu0 0.0
    %173 = vmatpush1.msra.mxu0 %v123
    %174 = vmatprep.subr.mxu0 0.0
    %175 = vmatpush1.msra.mxu0 %v124
    %176 = vmatprep.subr.mxu0 0.0
    %177 = vmatpush1.msra.mxu0 %v125
    %178 = vmatprep.subr.mxu0 0.0
    %179 = vmatpush1.msra.mxu0 %v126
    %180 = vmatprep.subr.mxu0 0.0
    %181 = vmatpush1.msra.mxu0 %v127
    %182 = vmatprep.subr.mxu0 0.0
    %183 = vmatpush1.msra.mxu0 %v128
    %184 = vmatprep.subr.mxu0 0.0
    %185 = vmatpush1.msra.mxu0 %v129
    %186 = vmatprep.subr.mxu0 0.0
    %187 = vmatpush1.msra.mxu0 %v130
    %188 = vmatprep.subr.mxu0 0.0
    %189 = vmatpush1.msra.mxu0 %v131
    %190 = vmatprep.subr.mxu0 0.0
    %191 = vmatpush1.msra.mxu0 %v132
    %192 = vmatprep.subr.mxu0 0.0
    %193 = vmatpush1.msra.mxu0 %v133
    %194 = vmatprep.subr.mxu0 0.0
    %195 = vmatpush1.msra.mxu0 %v134
    %196 = vmatprep.subr.mxu0 0.0
    %197 = vmatpush1.msra.mxu0 %v135
    %198 = vmatprep.subr.mxu0 0.0
    %199 = vmatpush1.msra.mxu0 %v136
    %200 = vmatprep.subr.mxu0 0.0
    %201 = vmatpush1.msra.mxu0 %v137
    %202 = vmatprep.subr.mxu0 0.0
    %203 = vmatpush1.msra.mxu0 %v138
    %204 = vmatprep.subr.mxu0 0.0
    %205 = vmatpush1.msra.mxu0 %v139
    %206 = vmatprep.subr.mxu0 0.0
    %207 = vmatpush1.msra.mxu0 %v140
    %208 = vmatprep.subr.mxu0 0.0
    %209 = vmatpush1.msra.mxu0 %v141
    %210 = vmatprep.subr.mxu0 0.0
    %211 = vmatpush1.msra.mxu0 %v142
    %212 = vmatprep.subr.mxu0 0.0
    %213 = vmatpush1.msra.mxu0 %v143
    %214 = vmatprep.subr.mxu0 0.0
    %215 = vmatpush1.msra.mxu0 %v144
    %216 = vmatprep.mubr.f32.mxu0 %v98
    %217 = vmatmul.mubr.f32.gmra.mrb[0].mxu0 %v97
    %v218 = vpop.f32.mrb[0].mxu0
    %v219 = vadd.f32 %v150, %v218
    %v220 = vpop.f32.mrb[0].mxu0
    %221 = vmatprep.mubr.f32.mxu0 %v100
    %222 = vmatmul.mubr.f32.gmra.mrb[0].mxu0 %v99
    %v223 = vpop.f32.mrb[0].mxu0
    %v224 = vadd.f32 %v150, %v223
    %v225 = vpop.f32.mrb[0].mxu0
    %226 = vmatprep.mubr.f32.mxu0 %v102
    %227 = vmatmul.mubr.f32.gmra.mrb[0].mxu0 %v101
    %v228 = vpop.f32.mrb[0].mxu0
    %v229 = vadd.f32 %v150, %v228
    %v230 = vpop.f32.mrb[0].mxu0
    %231 = vmatprep.mubr.f32.mxu0 %v104
    %232 = vmatmul.mubr.f32.gmra.mrb[0].mxu0 %v103
    %v233 = vpop.f32.mrb[0].mxu0
    %v234 = vadd.f32 %v150, %v233
    %v235 = vpop.f32.mrb[0].mxu0
    %236 = vmatprep.mubr.f32.mxu0 %v106
    %237 = vmatmul.mubr.f32.gmra.mrb[0].mxu0 %v105
    %v238 = vpop.f32.mrb[0].mxu0
    %v239 = vadd.f32 %v150, %v238
    %v240 = vpop.f32.mrb[0].mxu0
    %241 = vmatprep.mubr.f32.mxu0 %v108
    %242 = vmatmul.mubr.f32.gmra.mrb[0].mxu0 %v107
    %v243 = vpop.f32.mrb[0].mxu0
    %v244 = vadd.f32 %v150, %v243
    %v245 = vpop.f32.mrb[0].mxu0
    %246 = vmatprep.mubr.f32.mxu0 %v110
    %247 = vmatmul.mubr.f32.gmra.mrb[0].mxu0 %v109
    %v248 = vpop.f32.mrb[0].mxu0
    %v249 = vadd.f32 %v150, %v248
    %v250 = vpop.f32.mrb[0].mxu0
    %251 = vmatprep.mubr.f32.mxu0 %v112
    %252 = vmatmul.mubr.f32.gmra.mrb[0].mxu0 %v111
    %v253 = vpop.f32.mrb[0].mxu0
    %v254 = vadd.f32 %v150, %v253
    %v255 = vpop.f32.mrb[0].mxu0
    %256 = vdwg.mxu0
    %257 = vst [vmem:[#allocation2] sm:$0xff] %v219
    %258 = vst [vmem:[#allocation2 + $0x28] sm:$0xff] %v224
    %259 = vst [vmem:[#allocation2 + $0x50] sm:$0xff] %v229
    %260 = vst [vmem:[#allocation2 + $0x78] sm:$0xff] %v234
    %261 = vst [vmem:[#allocation2 + $0xa0] sm:$0xff] %v239
    %262 = vst [vmem:[#allocation2 + $0xc8] sm:$0xff] %v244
    %263 = vst [vmem:[#allocation2 + $0xf0] sm:$0xff] %v249
    %264 = vst [vmem:[#allocation2 + $0x118] sm:$0xff] %v254
    %v265 = vrot.slane %v219, 1
    %v266 = vrot.slane %v224, 1
    %v267 = vrot.slane %v229, 1
    %v268 = vrot.slane %v234, 1
    %v269 = vrot.slane %v239, 1
    %v270 = vrot.slane %v244, 1
    %v271 = vrot.slane %v249, 1
    %v272 = vrot.slane %v254, 1
    %v273 = vlaneseq
    %v274 = vshrl.u32 %v273, 7
    %vm275 = vcmp.lt.s32.totalorder %v274, 7
    %v276 = vsel %vm275, %v271, %v272
    %v277 = vsel %vm275, %v270, %v271
    %v278 = vsel %vm275, %v269, %v270
    %v279 = vsel %vm275, %v268, %v269
    %v280 = vsel %vm275, %v267, %v268
    %v281 = vsel %vm275, %v266, %v267
    %v282 = vsel %vm275, %v265, %v266
    %v283 = vsel %vm275, %v272, %v265
    %284 = vst [vmem:[#allocation2 + $0x8] sm:$0xff] %v282
    %285 = vst [vmem:[#allocation2 + $0x30] sm:$0xff] %v281
    %286 = vst [vmem:[#allocation2 + $0x58] sm:$0xff] %v280
    %287 = vst [vmem:[#allocation2 + $0x80] sm:$0xff] %v279
    %288 = vst [vmem:[#allocation2 + $0xa8] sm:$0xff] %v278
    %289 = vst [vmem:[#allocation2 + $0xd0] sm:$0xff] %v277
    %290 = vst [vmem:[#allocation2 + $0xf8] sm:$0xff] %v276
    %291 = vst [vmem:[#allocation2 + $0x120] sm:$0xff] %v283
    %v292 = vrot.slane %v219, 2
    %v293 = vrot.slane %v224, 2
    %v294 = vrot.slane %v229, 2
    %v295 = vrot.slane %v234, 2
    %v296 = vrot.slane %v239, 2
    %v297 = vrot.slane %v244, 2
    %v298 = vrot.slane %v249, 2
    %v299 = vrot.slane %v254, 2
    %vm300 = vcmp.lt.s32.totalorder %v274, 6
    %v301 = vsel %vm300, %v298, %v299
    %v302 = vsel %vm300, %v297, %v298
    %v303 = vsel %vm300, %v296, %v297
    %v304 = vsel %vm300, %v295, %v296
    %v305 = vsel %vm300, %v294, %v295
    %v306 = vsel %vm300, %v293, %v294
    %v307 = vsel %vm300, %v292, %v293
    %v308 = vsel %vm300, %v299, %v292
    %309 = vst [vmem:[#allocation2 + $0x10] sm:$0xff] %v307
    %310 = vst [vmem:[#allocation2 + $0x38] sm:$0xff] %v306
    %311 = vst [vmem:[#allocation2 + $0x60] sm:$0xff] %v305
    %312 = vst [vmem:[#allocation2 + $0x88] sm:$0xff] %v304
    %313 = vst [vmem:[#allocation2 + $0xb0] sm:$0xff] %v303
    %314 = vst [vmem:[#allocation2 + $0xd8] sm:$0xff] %v302
    %315 = vst [vmem:[#allocation2 + $0x100] sm:$0xff] %v301
    %316 = vst [vmem:[#allocation2 + $0x128] sm:$0xff] %v308
    %v317 = vrot.slane %v219, 3
    %v318 = vrot.slane %v224, 3
    %v319 = vrot.slane %v229, 3
    %v320 = vrot.slane %v234, 3
    %v321 = vrot.slane %v239, 3
    %v322 = vrot.slane %v244, 3
    %v323 = vrot.slane %v249, 3
    %v324 = vrot.slane %v254, 3
    %vm325 = vcmp.lt.s32.totalorder %v274, 5
    %v326 = vsel %vm325, %v323, %v324
    %v327 = vsel %vm325, %v322, %v323
    %v328 = vsel %vm325, %v321, %v322
    %v329 = vsel %vm325, %v320, %v321
    %v330 = vsel %vm325, %v319, %v320
    %v331 = vsel %vm325, %v318, %v319
    %v332 = vsel %vm325, %v317, %v318
    %v333 = vsel %vm325, %v324, %v317
    %334 = vst [vmem:[#allocation2 + $0x18] sm:$0xff] %v332
    %335 = vst [vmem:[#allocation2 + $0x40] sm:$0xff] %v331
    %336 = vst [vmem:[#allocation2 + $0x68] sm:$0xff] %v330
    %337 = vst [vmem:[#allocation2 + $0x90] sm:$0xff] %v329
    %338 = vst [vmem:[#allocation2 + $0xb8] sm:$0xff] %v328
    %339 = vst [vmem:[#allocation2 + $0xe0] sm:$0xff] %v327
    %340 = vst [vmem:[#allocation2 + $0x108] sm:$0xff] %v326
    %341 = vst [vmem:[#allocation2 + $0x130] sm:$0xff] %v333
    %v342 = vrot.slane %v219, 4
    %v343 = vrot.slane %v224, 4
    %v344 = vrot.slane %v229, 4
    %v345 = vrot.slane %v234, 4
    %v346 = vrot.slane %v239, 4
    %v347 = vrot.slane %v244, 4
    %v348 = vrot.slane %v249, 4
    %v349 = vrot.slane %v254, 4
    %vm350 = vcmp.lt.s32.totalorder %v274, 4
    %v351 = vsel %vm350, %v348, %v349
    %v352 = vsel %vm350, %v347, %v348
    %v353 = vsel %vm350, %v346, %v347
    %v354 = vsel %vm350, %v345, %v346
    %v355 = vsel %vm350, %v344, %v345
    %v356 = vsel %vm350, %v343, %v344
    %v357 = vsel %vm350, %v342, %v343
    %v358 = vsel %vm350, %v349, %v342
    %359 = vst [vmem:[#allocation2 + $0x20] sm:$0xff] %v357
    %360 = vst [vmem:[#allocation2 + $0x48] sm:$0xff] %v356
    %361 = vst [vmem:[#allocation2 + $0x70] sm:$0xff] %v355
    %362 = vst [vmem:[#allocation2 + $0x98] sm:$0xff] %v354
    %363 = vst [vmem:[#allocation2 + $0xc0] sm:$0xff] %v353
    %364 = vst [vmem:[#allocation2 + $0xe8] sm:$0xff] %v352
    %365 = vst [vmem:[#allocation2 + $0x110] sm:$0xff] %v351
    %366 = vst [vmem:[#allocation2 + $0x138] sm:$0xff] %v358
    %v367 = vld [vmem:[#allocation2] sm:$0xff]
    %v368 = vld [vmem:[#allocation2 + $0x8] sm:$0xff]
    %v369 = vld [vmem:[#allocation2 + $0x10] sm:$0xff]
    %v370 = vld [vmem:[#allocation2 + $0x18] sm:$0xff]
    %v371 = vld [vmem:[#allocation2 + $0x20] sm:$0xff]
    %v372 = vld [vmem:[#allocation2 + $0x28] sm:$0xff]
    %v373 = vld [vmem:[#allocation2 + $0x30] sm:$0xff]
    %v374 = vld [vmem:[#allocation2 + $0x38] sm:$0xff]
    %v375 = vld [vmem:[#allocation2 + $0x40] sm:$0xff]
    %v376 = vld [vmem:[#allocation2 + $0x48] sm:$0xff]
    %v377 = vld [vmem:[#allocation2 + $0x50] sm:$0xff]
    %v378 = vld [vmem:[#allocation2 + $0x58] sm:$0xff]
    %v379 = vld [vmem:[#allocation2 + $0x60] sm:$0xff]
    %v380 = vld [vmem:[#allocation2 + $0x68] sm:$0xff]
    %v381 = vld [vmem:[#allocation2 + $0x70] sm:$0xff]
    %v382 = vld [vmem:[#allocation2 + $0x78] sm:$0xff]
    %v383 = vld [vmem:[#allocation2 + $0x80] sm:$0xff]
    %v384 = vld [vmem:[#allocation2 + $0x88] sm:$0xff]
    %v385 = vld [vmem:[#allocation2 + $0x90] sm:$0xff]
    %v386 = vld [vmem:[#allocation2 + $0x98] sm:$0xff]
    %v387 = vld [vmem:[#allocation2 + $0xa0] sm:$0xff]
    %v388 = vld [vmem:[#allocation2 + $0xa8] sm:$0xff]
    %v389 = vld [vmem:[#allocation2 + $0xb0] sm:$0xff]
    %v390 = vld [vmem:[#allocation2 + $0xb8] sm:$0xff]
    %v391 = vld [vmem:[#allocation2 + $0xc0] sm:$0xff]
    %v392 = vld [vmem:[#allocation2 + $0xc8] sm:$0xff]
    %v393 = vld [vmem:[#allocation2 + $0xd0] sm:$0xff]
    %v394 = vld [vmem:[#allocation2 + $0xd8] sm:$0xff]
    %v395 = vld [vmem:[#allocation2 + $0xe0] sm:$0xff]
    %v396 = vld [vmem:[#allocation2 + $0xe8] sm:$0xff]
    %v397 = vld [vmem:[#allocation2 + $0xf0] sm:$0xff]
    %v398 = vld [vmem:[#allocation2 + $0xf8] sm:$0xff]
    %v399 = vld [vmem:[#allocation2 + $0x100] sm:$0xff]
    %v400 = vld [vmem:[#allocation2 + $0x108] sm:$0xff]
    %v401 = vld [vmem:[#allocation2 + $0x110] sm:$0xff]
    %v402 = vld [vmem:[#allocation2 + $0x118] sm:$0xff]
    %v403 = vld [vmem:[#allocation2 + $0x120] sm:$0xff]
    %v404 = vld [vmem:[#allocation2 + $0x128] sm:$0xff]
    %v405 = vld [vmem:[#allocation2 + $0x130] sm:$0xff]
    %v406 = vld [vmem:[#allocation2 + $0x138] sm:$0xff]
    %v407 = vld [vmem:[#allocation7] sm:$0xff]
    %v408 = vld [vmem:[#allocation7 + $0x8] sm:$0xff]
    %v409 = vld [vmem:[#allocation7 + $0x10] sm:$0xff]
    %v410 = vld [vmem:[#allocation7 + $0x18] sm:$0xff]
    %v411 = vld [vmem:[#allocation7 + $0x20] sm:$0xff]
    %v412 = vld [vmem:[#allocation7 + $0x28] sm:$0xff]
    %v413 = vld [vmem:[#allocation7 + $0x30] sm:$0xff]
    %v414 = vld [vmem:[#allocation7 + $0x38] sm:$0xff]
    %v415 = vld [vmem:[#allocation7 + $0x40] sm:$0xff]
    %v416 = vld [vmem:[#allocation7 + $0x48] sm:$0xff]
    %v417 = vld [vmem:[#allocation7 + $0x50] sm:$0xff]
    %v418 = vld [vmem:[#allocation7 + $0x58] sm:$0xff]
    %v419 = vld [vmem:[#allocation7 + $0x60] sm:$0xff]
    %v420 = vld [vmem:[#allocation7 + $0x68] sm:$0xff]
    %v421 = vld [vmem:[#allocation7 + $0x70] sm:$0xff]
    %v422 = vld [vmem:[#allocation7 + $0x78] sm:$0xff]
    %v423 = vld [vmem:[#allocation7 + $0x80] sm:$0xff]
    %v424 = vld [vmem:[#allocation7 + $0x88] sm:$0xff]
    %v425 = vld [vmem:[#allocation7 + $0x90] sm:$0xff]
    %v426 = vld [vmem:[#allocation7 + $0x98] sm:$0xff]
    %v427 = vld [vmem:[#allocation7 + $0xa0] sm:$0xff]
    %v428 = vld [vmem:[#allocation7 + $0xa8] sm:$0xff]
    %v429 = vld [vmem:[#allocation7 + $0xb0] sm:$0xff]
    %v430 = vld [vmem:[#allocation7 + $0xb8] sm:$0xff]
    %v431 = vld [vmem:[#allocation7 + $0xc0] sm:$0xff]
    %v432 = vld [vmem:[#allocation7 + $0xc8] sm:$0xff]
    %v433 = vld [vmem:[#allocation7 + $0xd0] sm:$0xff]
    %v434 = vld [vmem:[#allocation7 + $0xd8] sm:$0xff]
    %v435 = vld [vmem:[#allocation7 + $0xe0] sm:$0xff]
    %v436 = vld [vmem:[#allocation7 + $0xe8] sm:$0xff]
    %v437 = vld [vmem:[#allocation7 + $0xf0] sm:$0xff]
    %v438 = vld [vmem:[#allocation7 + $0xf8] sm:$0xff]
    %v439 = vld [vmem:[#allocation7 + $0x100] sm:$0xff]
    %v440 = vld [vmem:[#allocation7 + $0x108] sm:$0xff]
    %v441 = vld [vmem:[#allocation7 + $0x110] sm:$0xff]
    %v442 = vld [vmem:[#allocation7 + $0x118] sm:$0xff]
    %v443 = vld [vmem:[#allocation7 + $0x120] sm:$0xff]
    %v444 = vld [vmem:[#allocation7 + $0x128] sm:$0xff]
    %v445 = vld [vmem:[#allocation7 + $0x130] sm:$0xff]
    %v446 = vld [vmem:[#allocation7 + $0x138] sm:$0xff]
    %v447 = vld [vmem:[#allocation7 + $0x140] sm:$0xff]
    %v448 = vld [vmem:[#allocation7 + $0x148] sm:$0xff]
    %v449 = vld [vmem:[#allocation7 + $0x150] sm:$0xff]
    %v450 = vld [vmem:[#allocation7 + $0x158] sm:$0xff]
    %v451 = vld [vmem:[#allocation7 + $0x160] sm:$0xff]
    %v452 = vld [vmem:[#allocation7 + $0x168] sm:$0xff]
    %v453 = vld [vmem:[#allocation7 + $0x170] sm:$0xff]
    %v454 = vld [vmem:[#allocation7 + $0x178] sm:$0xff]
    %v455 = vld [vmem:[#allocation7 + $0x180] sm:$0xff]
    %v456 = vld [vmem:[#allocation7 + $0x188] sm:$0xff]
    %v457 = vld [vmem:[#allocation7 + $0x190] sm:$0xff]
    %v458 = vld [vmem:[#allocation7 + $0x198] sm:$0xff]
    %v459 = vld [vmem:[#allocation7 + $0x1a0] sm:$0xff]
    %v460 = vld [vmem:[#allocation7 + $0x1a8] sm:$0xff]
    %v461 = vld [vmem:[#allocation7 + $0x1b0] sm:$0xff]
    %v462 = vld [vmem:[#allocation7 + $0x1b8] sm:$0xff]
    %v463 = vld [vmem:[#allocation7 + $0x1c0] sm:$0xff]
    %v464 = vld [vmem:[#allocation7 + $0x1c8] sm:$0xff]
    %v465 = vld [vmem:[#allocation7 + $0x1d0] sm:$0xff]
    %v466 = vld [vmem:[#allocation7 + $0x1d8] sm:$0xff]
    %v467 = vld [vmem:[#allocation7 + $0x1e0] sm:$0xff]
    %v468 = vld [vmem:[#allocation7 + $0x1e8] sm:$0xff]
    %v469 = vld [vmem:[#allocation7 + $0x1f0] sm:$0xff]
    %v470 = vld [vmem:[#allocation7 + $0x1f8] sm:$0xff]
    %v471 = vld [vmem:[#allocation7 + $0x200] sm:$0xff]
    %v472 = vld [vmem:[#allocation7 + $0x208] sm:$0xff]
    %v473 = vld [vmem:[#allocation7 + $0x210] sm:$0xff]
    %v474 = vld [vmem:[#allocation7 + $0x218] sm:$0xff]
    %v475 = vld [vmem:[#allocation7 + $0x220] sm:$0xff]
    %v476 = vld [vmem:[#allocation7 + $0x228] sm:$0xff]
    %v477 = vld [vmem:[#allocation7 + $0x230] sm:$0xff]
    %v478 = vld [vmem:[#allocation7 + $0x238] sm:$0xff]
    %v479 = vld [vmem:[#allocation7 + $0x240] sm:$0xff]
    %v480 = vld [vmem:[#allocation7 + $0x248] sm:$0xff]
    %v481 = vld [vmem:[#allocation7 + $0x250] sm:$0xff]
    %v482 = vld [vmem:[#allocation7 + $0x258] sm:$0xff]
    %v483 = vld [vmem:[#allocation7 + $0x260] sm:$0xff]
    %v484 = vld [vmem:[#allocation7 + $0x268] sm:$0xff]
    %v485 = vld [vmem:[#allocation7 + $0x270] sm:$0xff]
    %v486 = vld [vmem:[#allocation7 + $0x278] sm:$0xff]
    %v487 = vld [vmem:[#allocation7 + $0x280] sm:$0xff]
    %v488 = vld [vmem:[#allocation7 + $0x288] sm:$0xff]
    %v489 = vld [vmem:[#allocation7 + $0x290] sm:$0xff]
    %v490 = vld [vmem:[#allocation7 + $0x298] sm:$0xff]
    %v491 = vld [vmem:[#allocation7 + $0x2a0] sm:$0xff]
    %v492 = vld [vmem:[#allocation7 + $0x2a8] sm:$0xff]
    %v493 = vld [vmem:[#allocation7 + $0x2b0] sm:$0xff]
    %v494 = vld [vmem:[#allocation7 + $0x2b8] sm:$0xff]
    %v495 = vld [vmem:[#allocation7 + $0x2c0] sm:$0xff]
    %v496 = vld [vmem:[#allocation7 + $0x2c8] sm:$0xff]
    %v497 = vld [vmem:[#allocation7 + $0x2d0] sm:$0xff]
    %v498 = vld [vmem:[#allocation7 + $0x2d8] sm:$0xff]
    %v499 = vld [vmem:[#allocation7 + $0x2e0] sm:$0xff]
    %v500 = vld [vmem:[#allocation7 + $0x2e8] sm:$0xff]
    %v501 = vld [vmem:[#allocation7 + $0x2f0] sm:$0xff]
    %v502 = vld [vmem:[#allocation7 + $0x2f8] sm:$0xff]
    %v503 = vld [vmem:[#allocation7 + $0x300] sm:$0xff]
    %v504 = vld [vmem:[#allocation7 + $0x308] sm:$0xff]
    %v505 = vld [vmem:[#allocation7 + $0x310] sm:$0xff]
    %v506 = vld [vmem:[#allocation7 + $0x318] sm:$0xff]
    %v507 = vld [vmem:[#allocation7 + $0x320] sm:$0xff]
    %v508 = vld [vmem:[#allocation7 + $0x328] sm:$0xff]
    %v509 = vld [vmem:[#allocation7 + $0x330] sm:$0xff]
    %v510 = vld [vmem:[#allocation7 + $0x338] sm:$0xff]
    %v511 = vld [vmem:[#allocation7 + $0x340] sm:$0xff]
    %v512 = vld [vmem:[#allocation7 + $0x348] sm:$0xff]
    %v513 = vld [vmem:[#allocation7 + $0x350] sm:$0xff]
    %v514 = vld [vmem:[#allocation7 + $0x358] sm:$0xff]
    %v515 = vld [vmem:[#allocation7 + $0x360] sm:$0xff]
    %v516 = vld [vmem:[#allocation7 + $0x368] sm:$0xff]
    %v517 = vld [vmem:[#allocation7 + $0x370] sm:$0xff]
    %v518 = vld [vmem:[#allocation7 + $0x378] sm:$0xff]
    %v519 = vld [vmem:[#allocation7 + $0x380] sm:$0xff]
    %v520 = vld [vmem:[#allocation7 + $0x388] sm:$0xff]
    %v521 = vld [vmem:[#allocation7 + $0x390] sm:$0xff]
    %v522 = vld [vmem:[#allocation7 + $0x398] sm:$0xff]
    %v523 = vld [vmem:[#allocation7 + $0x3a0] sm:$0xff]
    %v524 = vld [vmem:[#allocation7 + $0x3a8] sm:$0xff]
    %v525 = vld [vmem:[#allocation7 + $0x3b0] sm:$0xff]
    %v526 = vld [vmem:[#allocation7 + $0x3b8] sm:$0xff]
    %v527 = vld [vmem:[#allocation7 + $0x3c0] sm:$0xff]
    %v528 = vld [vmem:[#allocation7 + $0x3c8] sm:$0xff]
    %v529 = vld [vmem:[#allocation7 + $0x3d0] sm:$0xff]
    %v530 = vld [vmem:[#allocation7 + $0x3d8] sm:$0xff]
    %v531 = vld [vmem:[#allocation7 + $0x3e0] sm:$0xff]
    %v532 = vld [vmem:[#allocation7 + $0x3e8] sm:$0xff]
    %v533 = vld [vmem:[#allocation7 + $0x3f0] sm:$0xff]
    %v534 = vld [vmem:[#allocation7 + $0x3f8] sm:$0xff]
    %v535 = vld [vmem:[#allocation7 + $0x400] sm:$0xff]
    %v536 = vld [vmem:[#allocation7 + $0x408] sm:$0xff]
    %v537 = vld [vmem:[#allocation7 + $0x410] sm:$0xff]
    %v538 = vld [vmem:[#allocation7 + $0x418] sm:$0xff]
    %v539 = vld [vmem:[#allocation7 + $0x420] sm:$0xff]
    %v540 = vld [vmem:[#allocation7 + $0x428] sm:$0xff]
    %v541 = vld [vmem:[#allocation7 + $0x430] sm:$0xff]
    %v542 = vld [vmem:[#allocation7 + $0x438] sm:$0xff]
    %v543 = vld [vmem:[#allocation7 + $0x440] sm:$0xff]
    %v544 = vld [vmem:[#allocation7 + $0x448] sm:$0xff]
    %v545 = vld [vmem:[#allocation7 + $0x450] sm:$0xff]
    %v546 = vld [vmem:[#allocation7 + $0x458] sm:$0xff]
    %v547 = vld [vmem:[#allocation7 + $0x460] sm:$0xff]
    %v548 = vld [vmem:[#allocation7 + $0x468] sm:$0xff]
    %v549 = vld [vmem:[#allocation7 + $0x470] sm:$0xff]
    %v550 = vld [vmem:[#allocation7 + $0x478] sm:$0xff]
    %v551 = vld [vmem:[#allocation7 + $0x480] sm:$0xff]
    %v552 = vld [vmem:[#allocation7 + $0x488] sm:$0xff]
    %v553 = vld [vmem:[#allocation7 + $0x490] sm:$0xff]
    %v554 = vld [vmem:[#allocation7 + $0x498] sm:$0xff]
    %v555 = vld [vmem:[#allocation7 + $0x4a0] sm:$0xff]
    %v556 = vld [vmem:[#allocation7 + $0x4a8] sm:$0xff]
    %v557 = vld [vmem:[#allocation7 + $0x4b0] sm:$0xff]
    %v558 = vld [vmem:[#allocation7 + $0x4b8] sm:$0xff]
    %v559 = vld [vmem:[#allocation7 + $0x4c0] sm:$0xff]
    %v560 = vld [vmem:[#allocation7 + $0x4c8] sm:$0xff]
    %v561 = vld [vmem:[#allocation7 + $0x4d0] sm:$0xff]
    %v562 = vld [vmem:[#allocation7 + $0x4d8] sm:$0xff]
    %v563 = vld [vmem:[#allocation7 + $0x4e0] sm:$0xff]
    %v564 = vld [vmem:[#allocation7 + $0x4e8] sm:$0xff]
    %v565 = vld [vmem:[#allocation7 + $0x4f0] sm:$0xff]
    %v566 = vld [vmem:[#allocation7 + $0x4f8] sm:$0xff]
    %v567 = vld [vmem:[#allocation7 + $0x500] sm:$0xff]
    %v568 = vld [vmem:[#allocation7 + $0x508] sm:$0xff]
    %v569 = vld [vmem:[#allocation7 + $0x510] sm:$0xff]
    %v570 = vld [vmem:[#allocation7 + $0x518] sm:$0xff]
    %v571 = vld [vmem:[#allocation7 + $0x520] sm:$0xff]
    %v572 = vld [vmem:[#allocation7 + $0x528] sm:$0xff]
    %v573 = vld [vmem:[#allocation7 + $0x530] sm:$0xff]
    %v574 = vld [vmem:[#allocation7 + $0x538] sm:$0xff]
    %v575 = vld [vmem:[#allocation7 + $0x540] sm:$0xff]
    %v576 = vld [vmem:[#allocation7 + $0x548] sm:$0xff]
    %v577 = vld [vmem:[#allocation7 + $0x550] sm:$0xff]
    %v578 = vld [vmem:[#allocation7 + $0x558] sm:$0xff]
    %v579 = vld [vmem:[#allocation7 + $0x560] sm:$0xff]
    %v580 = vld [vmem:[#allocation7 + $0x568] sm:$0xff]
    %v581 = vld [vmem:[#allocation7 + $0x570] sm:$0xff]
    %v582 = vld [vmem:[#allocation7 + $0x578] sm:$0xff]
    %v583 = vld [vmem:[#allocation7 + $0x580] sm:$0xff]
    %v584 = vld [vmem:[#allocation7 + $0x588] sm:$0xff]
    %v585 = vld [vmem:[#allocation7 + $0x590] sm:$0xff]
    %v586 = vld [vmem:[#allocation7 + $0x598] sm:$0xff]
    %v587 = vld [vmem:[#allocation7 + $0x5a0] sm:$0xff]
    %v588 = vld [vmem:[#allocation7 + $0x5a8] sm:$0xff]
    %v589 = vld [vmem:[#allocation7 + $0x5b0] sm:$0xff]
    %v590 = vld [vmem:[#allocation7 + $0x5b8] sm:$0xff]
    %v591 = vld [vmem:[#allocation7 + $0x5c0] sm:$0xff]
    %v592 = vld [vmem:[#allocation7 + $0x5c8] sm:$0xff]
    %v593 = vld [vmem:[#allocation7 + $0x5d0] sm:$0xff]
    %v594 = vld [vmem:[#allocation7 + $0x5d8] sm:$0xff]
    %v595 = vld [vmem:[#allocation7 + $0x5e0] sm:$0xff]
    %v596 = vld [vmem:[#allocation7 + $0x5e8] sm:$0xff]
    %v597 = vld [vmem:[#allocation7 + $0x5f0] sm:$0xff]
    %v598 = vld [vmem:[#allocation7 + $0x5f8] sm:$0xff]
    %v599 = vld [vmem:[#allocation7 + $0x600] sm:$0xff]
    %v600 = vld [vmem:[#allocation7 + $0x608] sm:$0xff]
    %v601 = vld [vmem:[#allocation7 + $0x610] sm:$0xff]
    %v602 = vld [vmem:[#allocation7 + $0x618] sm:$0xff]
    %v603 = vld [vmem:[#allocation7 + $0x620] sm:$0xff]
    %v604 = vld [vmem:[#allocation7 + $0x628] sm:$0xff]
    %v605 = vld [vmem:[#allocation7 + $0x630] sm:$0xff]
    %v606 = vld [vmem:[#allocation7 + $0x638] sm:$0xff]
    %v607 = vld [vmem:[#allocation7 + $0x640] sm:$0xff]
    %v608 = vld [vmem:[#allocation7 + $0x648] sm:$0xff]
    %v609 = vld [vmem:[#allocation7 + $0x650] sm:$0xff]
    %v610 = vld [vmem:[#allocation7 + $0x658] sm:$0xff]
    %v611 = vld [vmem:[#allocation7 + $0x660] sm:$0xff]
    %v612 = vld [vmem:[#allocation7 + $0x668] sm:$0xff]
    %v613 = vld [vmem:[#allocation7 + $0x670] sm:$0xff]
    %v614 = vld [vmem:[#allocation7 + $0x678] sm:$0xff]
    %v615 = vld [vmem:[#allocation7 + $0x680] sm:$0xff]
    %v616 = vld [vmem:[#allocation7 + $0x688] sm:$0xff]
    %v617 = vld [vmem:[#allocation7 + $0x690] sm:$0xff]
    %v618 = vld [vmem:[#allocation7 + $0x698] sm:$0xff]
    %v619 = vld [vmem:[#allocation7 + $0x6a0] sm:$0xff]
    %v620 = vld [vmem:[#allocation7 + $0x6a8] sm:$0xff]
    %v621 = vld [vmem:[#allocation7 + $0x6b0] sm:$0xff]
    %v622 = vld [vmem:[#allocation7 + $0x6b8] sm:$0xff]
    %v623 = vld [vmem:[#allocation7 + $0x6c0] sm:$0xff]
    %v624 = vld [vmem:[#allocation7 + $0x6c8] sm:$0xff]
    %v625 = vld [vmem:[#allocation7 + $0x6d0] sm:$0xff]
    %v626 = vld [vmem:[#allocation7 + $0x6d8] sm:$0xff]
    %v627 = vld [vmem:[#allocation7 + $0x6e0] sm:$0xff]
    %v628 = vld [vmem:[#allocation7 + $0x6e8] sm:$0xff]
    %v629 = vld [vmem:[#allocation7 + $0x6f0] sm:$0xff]
    %v630 = vld [vmem:[#allocation7 + $0x6f8] sm:$0xff]
    %v631 = vld [vmem:[#allocation7 + $0x700] sm:$0xff]
    %v632 = vld [vmem:[#allocation7 + $0x708] sm:$0xff]
    %v633 = vld [vmem:[#allocation7 + $0x710] sm:$0xff]
    %v634 = vld [vmem:[#allocation7 + $0x718] sm:$0xff]
    %v635 = vld [vmem:[#allocation7 + $0x720] sm:$0xff]
    %v636 = vld [vmem:[#allocation7 + $0x728] sm:$0xff]
    %v637 = vld [vmem:[#allocation7 + $0x730] sm:$0xff]
    %v638 = vld [vmem:[#allocation7 + $0x738] sm:$0xff]
    %v639 = vld [vmem:[#allocation7 + $0x740] sm:$0xff]
    %v640 = vld [vmem:[#allocation7 + $0x748] sm:$0xff]
    %v641 = vld [vmem:[#allocation7 + $0x750] sm:$0xff]
    %v642 = vld [vmem:[#allocation7 + $0x758] sm:$0xff]
    %v643 = vld [vmem:[#allocation7 + $0x760] sm:$0xff]
    %v644 = vld [vmem:[#allocation7 + $0x768] sm:$0xff]
    %v645 = vld [vmem:[#allocation7 + $0x770] sm:$0xff]
    %v646 = vld [vmem:[#allocation7 + $0x778] sm:$0xff]
    %v647 = vld [vmem:[%s4] sm:$0x7]
    %v649 = vlaneseq
    %v650 = vshrl.u32 %v649, 7
    %v651 = vsub.s32 0, %v650
    %v652 = vrot.slane %v647, %v651
    %v653 = vlaneseq
    %v654 = vshrl.u32 %v653, 7
    %v655 = vsub.s32 1, %v654
    %v656 = vrot.slane %v647, %v655
    %v657 = vlaneseq
    %v658 = vshrl.u32 %v657, 7
    %v659 = vsub.s32 2, %v658
    %v660 = vrot.slane %v647, %v659
    %664 = vmatprep.subr.mxu0 %v408
    %665 = vmatpush1.msra.mxu0 %v407
    %666 = vmatprep.subr.mxu0 %v411
    %667 = vmatpush1.msra.mxu0 %v410
    %668 = vmatprep.subr.mxu0 %v414
    %669 = vmatpush1.msra.mxu0 %v413
    %670 = vmatprep.subr.mxu0 %v417
    %671 = vmatpush1.msra.mxu0 %v416
    %672 = vmatprep.subr.mxu0 %v420
    %673 = vmatpush1.msra.mxu0 %v419
    %674 = vmatprep.subr.mxu0 %v423
    %675 = vmatpush1.msra.mxu0 %v422
    %676 = vmatprep.subr.mxu0 %v426
    %677 = vmatpush1.msra.mxu0 %v425
    %678 = vmatprep.subr.mxu0 %v429
    %679 = vmatpush1.msra.mxu0 %v428
    %680 = vmatprep.subr.mxu0 %v432
    %681 = vmatpush1.msra.mxu0 %v431
    %682 = vmatprep.subr.mxu0 %v435
    %683 = vmatpush1.msra.mxu0 %v434
    %684 = vmatprep.subr.mxu0 %v438
    %685 = vmatpush1.msra.mxu0 %v437
    %686 = vmatprep.subr.mxu0 %v441
    %687 = vmatpush1.msra.mxu0 %v440
    %688 = vmatprep.subr.mxu0 %v444
    %689 = vmatpush1.msra.mxu0 %v443
    %690 = vmatprep.subr.mxu0 %v447
    %691 = vmatpush1.msra.mxu0 %v446
    %692 = vmatprep.subr.mxu0 %v450
    %693 = vmatpush1.msra.mxu0 %v449
    %694 = vmatprep.subr.mxu0 %v453
    %695 = vmatpush1.msra.mxu0 %v452
    %696 = vmatprep.subr.mxu0 %v456
    %697 = vmatpush1.msra.mxu0 %v455
    %698 = vmatprep.subr.mxu0 %v459
    %699 = vmatpush1.msra.mxu0 %v458
    %700 = vmatprep.subr.mxu0 %v462
    %701 = vmatpush1.msra.mxu0 %v461
    %702 = vmatprep.subr.mxu0 %v465
    %703 = vmatpush1.msra.mxu0 %v464
    %704 = vmatprep.subr.mxu0 %v468
    %705 = vmatpush1.msra.mxu0 %v467
    %706 = vmatprep.subr.mxu0 %v471
    %707 = vmatpush1.msra.mxu0 %v470
    %708 = vmatprep.subr.mxu0 %v474
    %709 = vmatpush1.msra.mxu0 %v473
    %710 = vmatprep.subr.mxu0 %v477
    %711 = vmatpush1.msra.mxu0 %v476
    %712 = vmatprep.subr.mxu0 %v480
    %713 = vmatpush1.msra.mxu0 %v479
    %714 = vmatprep.subr.mxu0 %v483
    %715 = vmatpush1.msra.mxu0 %v482
    %716 = vmatprep.subr.mxu0 %v486
    %717 = vmatpush1.msra.mxu0 %v485
    %718 = vmatprep.subr.mxu0 %v489
    %719 = vmatpush1.msra.mxu0 %v488
    %720 = vmatprep.subr.mxu0 %v492
    %721 = vmatpush1.msra.mxu0 %v491
    %722 = vmatprep.subr.mxu0 %v495
    %723 = vmatpush1.msra.mxu0 %v494
    %724 = vmatprep.subr.mxu0 %v498
    %725 = vmatpush1.msra.mxu0 %v497
    %726 = vmatprep.subr.mxu0 %v501
    %727 = vmatpush1.msra.mxu0 %v500
    %728 = vmatprep.mubr.f32.mxu0 %v368
    %729 = vmatmul.mubr.f32.gmra.mrb[0].mxu0 %v367
    %v730 = vpop.f32.mrb[0].mxu0
    %v731 = vadd.f32 %v652, %v730
    %v732 = vpop.f32.mrb[0].mxu0
    %v733 = vadd.f32 %v656, %v732
    %734 = vmatprep.mubr.f32.mxu0 %v373
    %735 = vmatmul.mubr.f32.gmra.mrb[0].mxu0 %v372
    %v736 = vpop.f32.mrb[0].mxu0
    %v737 = vadd.f32 %v652, %v736
    %v738 = vpop.f32.mrb[0].mxu0
    %v739 = vadd.f32 %v656, %v738
    %740 = vmatprep.mubr.f32.mxu0 %v378
    %741 = vmatmul.mubr.f32.gmra.mrb[0].mxu0 %v377
    %v742 = vpop.f32.mrb[0].mxu0
    %v743 = vadd.f32 %v652, %v742
    %v744 = vpop.f32.mrb[0].mxu0
    %v745 = vadd.f32 %v656, %v744
    %746 = vmatprep.mubr.f32.mxu0 %v383
    %747 = vmatmul.mubr.f32.gmra.mrb[0].mxu0 %v382
    %v748 = vpop.f32.mrb[0].mxu0
    %v749 = vadd.f32 %v652, %v748
    %v750 = vpop.f32.mrb[0].mxu0
    %v751 = vadd.f32 %v656, %v750
    %752 = vmatprep.mubr.f32.mxu0 %v388
    %753 = vmatmul.mubr.f32.gmra.mrb[0].mxu0 %v387
    %v754 = vpop.f32.mrb[0].mxu0
    %v755 = vadd.f32 %v652, %v754
    %v756 = vpop.f32.mrb[0].mxu0
    %v757 = vadd.f32 %v656, %v756
    %758 = vmatprep.mubr.f32.mxu0 %v393
    %759 = vmatmul.mubr.f32.gmra.mrb[0].mxu0 %v392
    %v760 = vpop.f32.mrb[0].mxu0
    %v761 = vadd.f32 %v652, %v760
    %v762 = vpop.f32.mrb[0].mxu0
    %v763 = vadd.f32 %v656, %v762
    %764 = vmatprep.mubr.f32.mxu0 %v398
    %765 = vmatmul.mubr.f32.gmra.mrb[0].mxu0 %v397
    %v766 = vpop.f32.mrb[0].mxu0
    %v767 = vadd.f32 %v652, %v766
    %v768 = vpop.f32.mrb[0].mxu0
    %v769 = vadd.f32 %v656, %v768
    %770 = vmatprep.mubr.f32.mxu0 %v403
    %771 = vmatmul.mubr.f32.gmra.mrb[0].mxu0 %v402
    %v772 = vpop.f32.mrb[0].mxu0
    %v773 = vadd.f32 %v652, %v772
    %v774 = vpop.f32.mrb[0].mxu0
    %v775 = vadd.f32 %v656, %v774
    %776 = vdwg.mxu0
    %777 = vmatprep.subr.mxu0 %v504
    %778 = vmatpush1.msra.mxu0 %v503
    %779 = vmatprep.subr.mxu0 %v507
    %780 = vmatpush1.msra.mxu0 %v506
    %781 = vmatprep.subr.mxu0 %v510
    %782 = vmatpush1.msra.mxu0 %v509
    %783 = vmatprep.subr.mxu0 %v513
    %784 = vmatpush1.msra.mxu0 %v512
    %785 = vmatprep.subr.mxu0 %v516
    %786 = vmatpush1.msra.mxu0 %v515
    %787 = vmatprep.subr.mxu0 %v519
    %788 = vmatpush1.msra.mxu0 %v518
    %789 = vmatprep.subr.mxu0 %v522
    %790 = vmatpush1.msra.mxu0 %v521
    %791 = vmatprep.subr.mxu0 %v525
    %792 = vmatpush1.msra.mxu0 %v524
    %793 = vmatprep.subr.mxu0 %v528
    %794 = vmatpush1.msra.mxu0 %v527
    %795 = vmatprep.subr.mxu0 %v531
    %796 = vmatpush1.msra.mxu0 %v530
    %797 = vmatprep.subr.mxu0 %v534
    %798 = vmatpush1.msra.mxu0 %v533
    %799 = vmatprep.subr.mxu0 %v537
    %800 = vmatpush1.msra.mxu0 %v536
    %801 = vmatprep.subr.mxu0 %v540
    %802 = vmatpush1.msra.mxu0 %v539
    %803 = vmatprep.subr.mxu0 %v543
    %804 = vmatpush1.msra.mxu0 %v542
    %805 = vmatprep.subr.mxu0 %v546
    %806 = vmatpush1.msra.mxu0 %v545
    %807 = vmatprep.subr.mxu0 %v549
    %808 = vmatpush1.msra.mxu0 %v548
    %809 = vmatprep.subr.mxu0 %v552
    %810 = vmatpush1.msra.mxu0 %v551
    %811 = vmatprep.subr.mxu0 %v555
    %812 = vmatpush1.msra.mxu0 %v554
    %813 = vmatprep.subr.mxu0 %v558
    %814 = vmatpush1.msra.mxu0 %v557
    %815 = vmatprep.subr.mxu0 %v561
    %816 = vmatpush1.msra.mxu0 %v560
    %817 = vmatprep.subr.mxu0 %v564
    %818 = vmatpush1.msra.mxu0 %v563
    %819 = vmatprep.subr.mxu0 %v567
    %820 = vmatpush1.msra.mxu0 %v566
    %821 = vmatprep.subr.mxu0 %v570
    %822 = vmatpush1.msra.mxu0 %v569
    %823 = vmatprep.subr.mxu0 %v573
    %824 = vmatpush1.msra.mxu0 %v572
    %825 = vmatprep.subr.mxu0 %v576
    %826 = vmatpush1.msra.mxu0 %v575
    %827 = vmatprep.subr.mxu0 %v579
    %828 = vmatpush1.msra.mxu0 %v578
    %829 = vmatprep.subr.mxu0 %v582
    %830 = vmatpush1.msra.mxu0 %v581
    %831 = vmatprep.subr.mxu0 %v585
    %832 = vmatpush1.msra.mxu0 %v584
    %833 = vmatprep.subr.mxu0 %v588
    %834 = vmatpush1.msra.mxu0 %v587
    %835 = vmatprep.subr.mxu0 %v591
    %836 = vmatpush1.msra.mxu0 %v590
    %837 = vmatprep.subr.mxu0 %v594
    %838 = vmatpush1.msra.mxu0 %v593
    %839 = vmatprep.subr.mxu0 %v597
    %840 = vmatpush1.msra.mxu0 %v596
    %841 = vmatprep.mubr.f32.mxu0 %v370
    %842 = vmatmul.mubr.f32.gmra.mrb[0].mxu0 %v369
    %v843 = vpop.f32.mrb[0].mxu0
    %v844 = vadd.f32 %v731, %v843
    %v845 = vpop.f32.mrb[0].mxu0
    %v846 = vadd.f32 %v733, %v845
    %847 = vmatprep.mubr.f32.mxu0 %v375
    %848 = vmatmul.mubr.f32.gmra.mrb[0].mxu0 %v374
    %v849 = vpop.f32.mrb[0].mxu0
    %v850 = vadd.f32 %v737, %v849
    %v851 = vpop.f32.mrb[0].mxu0
    %v852 = vadd.f32 %v739, %v851
    %853 = vmatprep.mubr.f32.mxu0 %v380
    %854 = vmatmul.mubr.f32.gmra.mrb[0].mxu0 %v379
    %v855 = vpop.f32.mrb[0].mxu0
    %v856 = vadd.f32 %v743, %v855
    %v857 = vpop.f32.mrb[0].mxu0
    %v858 = vadd.f32 %v745, %v857
    %859 = vmatprep.mubr.f32.mxu0 %v385
    %860 = vmatmul.mubr.f32.gmra.mrb[0].mxu0 %v384
    %v861 = vpop.f32.mrb[0].mxu0
    %v862 = vadd.f32 %v749, %v861
    %v863 = vpop.f32.mrb[0].mxu0
    %v864 = vadd.f32 %v751, %v863
    %865 = vmatprep.mubr.f32.mxu0 %v390
    %866 = vmatmul.mubr.f32.gmra.mrb[0].mxu0 %v389
    %v867 = vpop.f32.mrb[0].mxu0
    %v868 = vadd.f32 %v755, %v867
    %v869 = vpop.f32.mrb[0].mxu0
    %v870 = vadd.f32 %v757, %v869
    %871 = vmatprep.mubr.f32.mxu0 %v395
    %872 = vmatmul.mubr.f32.gmra.mrb[0].mxu0 %v394
    %v873 = vpop.f32.mrb[0].mxu0
    %v874 = vadd.f32 %v761, %v873
    %v875 = vpop.f32.mrb[0].mxu0
    %v876 = vadd.f32 %v763, %v875
    %877 = vmatprep.mubr.f32.mxu0 %v400
    %878 = vmatmul.mubr.f32.gmra.mrb[0].mxu0 %v399
    %v879 = vpop.f32.mrb[0].mxu0
    %v880 = vadd.f32 %v767, %v879
    %v881 = vpop.f32.mrb[0].mxu0
    %v882 = vadd.f32 %v769, %v881
    %883 = vmatprep.mubr.f32.mxu0 %v405
    %884 = vmatmul.mubr.f32.gmra.mrb[0].mxu0 %v404
    %v885 = vpop.f32.mrb[0].mxu0
    %v886 = vadd.f32 %v773, %v885
    %v887 = vpop.f32.mrb[0].mxu0
    %v888 = vadd.f32 %v775, %v887
    %889 = vdwg.mxu0
    %890 = vmatprep.subr.mxu0 %v600
    %891 = vmatpush1.msra.mxu0 %v599
    %892 = vmatprep.subr.mxu0 %v603
    %893 = vmatpush1.msra.mxu0 %v602
    %894 = vmatprep.subr.mxu0 %v606
    %895 = vmatpush1.msra.mxu0 %v605
    %896 = vmatprep.subr.mxu0 %v609
    %897 = vmatpush1.msra.mxu0 %v608
    %898 = vmatprep.subr.mxu0 %v612
    %899 = vmatpush1.msra.mxu0 %v611
    %900 = vmatprep.subr.mxu0 %v615
    %901 = vmatpush1.msra.mxu0 %v614
    %902 = vmatprep.subr.mxu0 %v618
    %903 = vmatpush1.msra.mxu0 %v617
    %904 = vmatprep.subr.mxu0 %v621
    %905 = vmatpush1.msra.mxu0 %v620
    %906 = vmatprep.subr.mxu0 %v624
    %907 = vmatpush1.msra.mxu0 %v623
    %908 = vmatprep.subr.mxu0 %v627
    %909 = vmatpush1.msra.mxu0 %v626
    %910 = vmatprep.subr.mxu0 %v630
    %911 = vmatpush1.msra.mxu0 %v629
    %912 = vmatprep.subr.mxu0 %v633
    %913 = vmatpush1.msra.mxu0 %v632
    %914 = vmatprep.subr.mxu0 %v636
    %915 = vmatpush1.msra.mxu0 %v635
    %916 = vmatprep.subr.mxu0 %v639
    %917 = vmatpush1.msra.mxu0 %v638
    %918 = vmatprep.subr.mxu0 %v642
    %919 = vmatpush1.msra.mxu0 %v641
    %920 = vmatprep.subr.mxu0 %v645
    %921 = vmatpush1.msra.mxu0 %v644
    %922 = vmatprep.subr.mxu0 0.0
    %923 = vmatpush1.msra.mxu0 0.0
    %924 = vmatprep.subr.mxu0 0.0
    %925 = vmatpush1.msra.mxu0 0.0
    %926 = vmatprep.subr.mxu0 0.0
    %927 = vmatpush1.msra.mxu0 0.0
    %928 = vmatprep.subr.mxu0 0.0
    %929 = vmatpush1.msra.mxu0 0.0
    %930 = vmatprep.subr.mxu0 0.0
    %931 = vmatpush1.msra.mxu0 0.0
    %932 = vmatprep.subr.mxu0 0.0
    %933 = vmatpush1.msra.mxu0 0.0
    %934 = vmatprep.subr.mxu0 0.0
    %935 = vmatpush1.msra.mxu0 0.0
    %936 = vmatprep.subr.mxu0 0.0
    %937 = vmatpush1.msra.mxu0 0.0
    %938 = vmatprep.subr.mxu0 0.0
    %939 = vmatpush1.msra.mxu0 0.0
    %940 = vmatprep.subr.mxu0 0.0
    %941 = vmatpush1.msra.mxu0 0.0
    %942 = vmatprep.subr.mxu0 0.0
    %943 = vmatpush1.msra.mxu0 0.0
    %944 = vmatprep.subr.mxu0 0.0
    %945 = vmatpush1.msra.mxu0 0.0
    %946 = vmatprep.subr.mxu0 0.0
    %947 = vmatpush1.msra.mxu0 0.0
    %948 = vmatprep.subr.mxu0 0.0
    %949 = vmatpush1.msra.mxu0 0.0
    %950 = vmatprep.subr.mxu0 0.0
    %951 = vmatpush1.msra.mxu0 0.0
    %952 = vmatprep.subr.mxu0 0.0
    %953 = vmatpush1.msra.mxu0 0.0
    %954 = vmatprep.mubr.f32.mxu0 0.0
    %955 = vmatmul.mubr.f32.gmra.mrb[0].mxu0 %v371
    %v956 = vpop.f32.mrb[0].mxu0
    %v957 = vadd.f32 %v844, %v956
    %v958 = vpop.f32.mrb[0].mxu0
    %v959 = vadd.f32 %v846, %v958
    %960 = vmatprep.mubr.f32.mxu0 0.0
    %961 = vmatmul.mubr.f32.gmra.mrb[0].mxu0 %v376
    %v962 = vpop.f32.mrb[0].mxu0
    %v963 = vadd.f32 %v850, %v962
    %v964 = vpop.f32.mrb[0].mxu0
    %v965 = vadd.f32 %v852, %v964
    %966 = vmatprep.mubr.f32.mxu0 0.0
    %967 = vmatmul.mubr.f32.gmra.mrb[0].mxu0 %v381
    %v968 = vpop.f32.mrb[0].mxu0
    %v969 = vadd.f32 %v856, %v968
    %v970 = vpop.f32.mrb[0].mxu0
    %v971 = vadd.f32 %v858, %v970
    %972 = vmatprep.mubr.f32.mxu0 0.0
    %973 = vmatmul.mubr.f32.gmra.mrb[0].mxu0 %v386
    %v974 = vpop.f32.mrb[0].mxu0
    %v975 = vadd.f32 %v862, %v974
    %v976 = vpop.f32.mrb[0].mxu0
    %v977 = vadd.f32 %v864, %v976
    %978 = vmatprep.mubr.f32.mxu0 0.0
    %979 = vmatmul.mubr.f32.gmra.mrb[0].mxu0 %v391
    %v980 = vpop.f32.mrb[0].mxu0
    %v981 = vadd.f32 %v868, %v980
    %v982 = vpop.f32.mrb[0].mxu0
    %v983 = vadd.f32 %v870, %v982
    %984 = vmatprep.mubr.f32.mxu0 0.0
    %985 = vmatmul.mubr.f32.gmra.mrb[0].mxu0 %v396
    %v986 = vpop.f32.mrb[0].mxu0
    %v987 = vadd.f32 %v874, %v986
    %v988 = vpop.f32.mrb[0].mxu0
    %v989 = vadd.f32 %v876, %v988
    %990 = vmatprep.mubr.f32.mxu0 0.0
    %991 = vmatmul.mubr.f32.gmra.mrb[0].mxu0 %v401
    %v992 = vpop.f32.mrb[0].mxu0
    %v993 = vadd.f32 %v880, %v992
    %v994 = vpop.f32.mrb[0].mxu0
    %v995 = vadd.f32 %v882, %v994
    %996 = vmatprep.mubr.f32.mxu0 0.0
    %997 = vmatmul.mubr.f32.gmra.mrb[0].mxu0 %v406
    %v998 = vpop.f32.mrb[0].mxu0
    %v999 = vadd.f32 %v886, %v998
    %v1000 = vpop.f32.mrb[0].mxu0
    %v1001 = vadd.f32 %v888, %v1000
    %1002 = vdwg.mxu0
    %1003 = vmatprep.subr.mxu0 0.0
    %1004 = vmatpush1.msra.mxu0 %v409
    %1005 = vmatprep.subr.mxu0 0.0
    %1006 = vmatpush1.msra.mxu0 %v412
    %1007 = vmatprep.subr.mxu0 0.0
    %1008 = vmatpush1.msra.mxu0 %v415
    %1009 = vmatprep.subr.mxu0 0.0
    %1010 = vmatpush1.msra.mxu0 %v418
    %1011 = vmatprep.subr.mxu0 0.0
    %1012 = vmatpush1.msra.mxu0 %v421
    %1013 = vmatprep.subr.mxu0 0.0
    %1014 = vmatpush1.msra.mxu0 %v424
    %1015 = vmatprep.subr.mxu0 0.0
    %1016 = vmatpush1.msra.mxu0 %v427
    %1017 = vmatprep.subr.mxu0 0.0
    %1018 = vmatpush1.msra.mxu0 %v430
    %1019 = vmatprep.subr.mxu0 0.0
    %1020 = vmatpush1.msra.mxu0 %v433
    %1021 = vmatprep.subr.mxu0 0.0
    %1022 = vmatpush1.msra.mxu0 %v436
    %1023 = vmatprep.subr.mxu0 0.0
    %1024 = vmatpush1.msra.mxu0 %v439
    %1025 = vmatprep.subr.mxu0 0.0
    %1026 = vmatpush1.msra.mxu0 %v442
    %1027 = vmatprep.subr.mxu0 0.0
    %1028 = vmatpush1.msra.mxu0 %v445
    %1029 = vmatprep.subr.mxu0 0.0
    %1030 = vmatpush1.msra.mxu0 %v448
    %1031 = vmatprep.subr.mxu0 0.0
    %1032 = vmatpush1.msra.mxu0 %v451
    %1033 = vmatprep.subr.mxu0 0.0
    %1034 = vmatpush1.msra.mxu0 %v454
    %1035 = vmatprep.subr.mxu0 0.0
    %1036 = vmatpush1.msra.mxu0 %v457
    %1037 = vmatprep.subr.mxu0 0.0
    %1038 = vmatpush1.msra.mxu0 %v460
    %1039 = vmatprep.subr.mxu0 0.0
    %1040 = vmatpush1.msra.mxu0 %v463
    %1041 = vmatprep.subr.mxu0 0.0
    %1042 = vmatpush1.msra.mxu0 %v466
    %1043 = vmatprep.subr.mxu0 0.0
    %1044 = vmatpush1.msra.mxu0 %v469
    %1045 = vmatprep.subr.mxu0 0.0
    %1046 = vmatpush1.msra.mxu0 %v472
    %1047 = vmatprep.subr.mxu0 0.0
    %1048 = vmatpush1.msra.mxu0 %v475
    %1049 = vmatprep.subr.mxu0 0.0
    %1050 = vmatpush1.msra.mxu0 %v478
    %1051 = vmatprep.subr.mxu0 0.0
    %1052 = vmatpush1.msra.mxu0 %v481
    %1053 = vmatprep.subr.mxu0 0.0
    %1054 = vmatpush1.msra.mxu0 %v484
    %1055 = vmatprep.subr.mxu0 0.0
    %1056 = vmatpush1.msra.mxu0 %v487
    %1057 = vmatprep.subr.mxu0 0.0
    %1058 = vmatpush1.msra.mxu0 %v490
    %1059 = vmatprep.subr.mxu0 0.0
    %1060 = vmatpush1.msra.mxu0 %v493
    %1061 = vmatprep.subr.mxu0 0.0
    %1062 = vmatpush1.msra.mxu0 %v496
    %1063 = vmatprep.subr.mxu0 0.0
    %1064 = vmatpush1.msra.mxu0 %v499
    %1065 = vmatprep.subr.mxu0 0.0
    %1066 = vmatpush1.msra.mxu0 %v502
    %1067 = vmatprep.mubr.f32.mxu0 %v368
    %1068 = vmatmul.mubr.f32.gmra.mrb[0].mxu0 %v367
    %v1069 = vpop.f32.mrb[0].mxu0
    %v1070 = vadd.f32 %v660, %v1069
    %v1071 = vpop.f32.mrb[0].mxu0
    %1072 = vmatprep.mubr.f32.mxu0 %v373
    %1073 = vmatmul.mubr.f32.gmra.mrb[0].mxu0 %v372
    %v1074 = vpop.f32.mrb[0].mxu0
    %v1075 = vadd.f32 %v660, %v1074
    %v1076 = vpop.f32.mrb[0].mxu0
    %1077 = vmatprep.mubr.f32.mxu0 %v378
    %1078 = vmatmul.mubr.f32.gmra.mrb[0].mxu0 %v377
    %v1079 = vpop.f32.mrb[0].mxu0
    %v1080 = vadd.f32 %v660, %v1079
    %v1081 = vpop.f32.mrb[0].mxu0
    %1082 = vmatprep.mubr.f32.mxu0 %v383
    %1083 = vmatmul.mubr.f32.gmra.mrb[0].mxu0 %v382
    %v1084 = vpop.f32.mrb[0].mxu0
    %v1085 = vadd.f32 %v660, %v1084
    %v1086 = vpop.f32.mrb[0].mxu0
    %1087 = vmatprep.mubr.f32.mxu0 %v388
    %1088 = vmatmul.mubr.f32.gmra.mrb[0].mxu0 %v387
    %v1089 = vpop.f32.mrb[0].mxu0
    %v1090 = vadd.f32 %v660, %v1089
    %v1091 = vpop.f32.mrb[0].mxu0
    %1092 = vmatprep.mubr.f32.mxu0 %v393
    %1093 = vmatmul.mubr.f32.gmra.mrb[0].mxu0 %v392
    %v1094 = vpop.f32.mrb[0].mxu0
    %v1095 = vadd.f32 %v660, %v1094
    %v1096 = vpop.f32.mrb[0].mxu0
    %1097 = vmatprep.mubr.f32.mxu0 %v398
    %1098 = vmatmul.mubr.f32.gmra.mrb[0].mxu0 %v397
    %v1099 = vpop.f32.mrb[0].mxu0
    %v1100 = vadd.f32 %v660, %v1099
    %v1101 = vpop.f32.mrb[0].mxu0
    %1102 = vmatprep.mubr.f32.mxu0 %v403
    %1103 = vmatmul.mubr.f32.gmra.mrb[0].mxu0 %v402
    %v1104 = vpop.f32.mrb[0].mxu0
    %v1105 = vadd.f32 %v660, %v1104
    %v1106 = vpop.f32.mrb[0].mxu0
    %1107 = vdwg.mxu0
    %1108 = vmatprep.subr.mxu0 0.0
    %1109 = vmatpush1.msra.mxu0 %v505
    %1110 = vmatprep.subr.mxu0 0.0
    %1111 = vmatpush1.msra.mxu0 %v508
    %1112 = vmatprep.subr.mxu0 0.0
    %1113 = vmatpush1.msra.mxu0 %v511
    %1114 = vmatprep.subr.mxu0 0.0
    %1115 = vmatpush1.msra.mxu0 %v514
    %1116 = vmatprep.subr.mxu0 0.0
    %1117 = vmatpush1.msra.mxu0 %v517
    %1118 = vmatprep.subr.mxu0 0.0
    %1119 = vmatpush1.msra.mxu0 %v520
    %1120 = vmatprep.subr.mxu0 0.0
    %1121 = vmatpush1.msra.mxu0 %v523
    %1122 = vmatprep.subr.mxu0 0.0
    %1123 = vmatpush1.msra.mxu0 %v526
    %1124 = vmatprep.subr.mxu0 0.0
    %1125 = vmatpush1.msra.mxu0 %v529
    %1126 = vmatprep.subr.mxu0 0.0
    %1127 = vmatpush1.msra.mxu0 %v532
    %1128 = vmatprep.subr.mxu0 0.0
    %1129 = vmatpush1.msra.mxu0 %v535
    %1130 = vmatprep.subr.mxu0 0.0
    %1131 = vmatpush1.msra.mxu0 %v538
    %1132 = vmatprep.subr.mxu0 0.0
    %1133 = vmatpush1.msra.mxu0 %v541
    %1134 = vmatprep.subr.mxu0 0.0
    %1135 = vmatpush1.msra.mxu0 %v544
    %1136 = vmatprep.subr.mxu0 0.0
    %1137 = vmatpush1.msra.mxu0 %v547
    %1138 = vmatprep.subr.mxu0 0.0
    %1139 = vmatpush1.msra.mxu0 %v550
    %1140 = vmatprep.subr.mxu0 0.0
    %1141 = vmatpush1.msra.mxu0 %v553
    %1142 = vmatprep.subr.mxu0 0.0
    %1143 = vmatpush1.msra.mxu0 %v556
    %1144 = vmatprep.subr.mxu0 0.0
    %1145 = vmatpush1.msra.mxu0 %v559
    %1146 = vmatprep.subr.mxu0 0.0
    %1147 = vmatpush1.msra.mxu0 %v562
    %1148 = vmatprep.subr.mxu0 0.0
    %1149 = vmatpush1.msra.mxu0 %v565
    %1150 = vmatprep.subr.mxu0 0.0
    %1151 = vmatpush1.msra.mxu0 %v568
    %1152 = vmatprep.subr.mxu0 0.0
    %1153 = vmatpush1.msra.mxu0 %v571
    %1154 = vmatprep.subr.mxu0 0.0
    %1155 = vmatpush1.msra.mxu0 %v574
    %1156 = vmatprep.subr.mxu0 0.0
    %1157 = vmatpush1.msra.mxu0 %v577
    %1158 = vmatprep.subr.mxu0 0.0
    %1159 = vmatpush1.msra.mxu0 %v580
    %1160 = vmatprep.subr.mxu0 0.0
    %1161 = vmatpush1.msra.mxu0 %v583
    %1162 = vmatprep.subr.mxu0 0.0
    %1163 = vmatpush1.msra.mxu0 %v586
    %1164 = vmatprep.subr.mxu0 0.0
    %1165 = vmatpush1.msra.mxu0 %v589
    %1166 = vmatprep.subr.mxu0 0.0
    %1167 = vmatpush1.msra.mxu0 %v592
    %1168 = vmatprep.subr.mxu0 0.0
    %1169 = vmatpush1.msra.mxu0 %v595
    %1170 = vmatprep.subr.mxu0 0.0
    %1171 = vmatpush1.msra.mxu0 %v598
    %1172 = vmatprep.mubr.f32.mxu0 %v370
    %1173 = vmatmul.mubr.f32.gmra.mrb[0].mxu0 %v369
    %v1174 = vpop.f32.mrb[0].mxu0
    %v1175 = vadd.f32 %v1070, %v1174
    %v1176 = vpop.f32.mrb[0].mxu0
    %1177 = vmatprep.mubr.f32.mxu0 %v375
    %1178 = vmatmul.mubr.f32.gmra.mrb[0].mxu0 %v374
    %v1179 = vpop.f32.mrb[0].mxu0
    %v1180 = vadd.f32 %v1075, %v1179
    %v1181 = vpop.f32.mrb[0].mxu0
    %1182 = vmatprep.mubr.f32.mxu0 %v380
    %1183 = vmatmul.mubr.f32.gmra.mrb[0].mxu0 %v379
    %v1184 = vpop.f32.mrb[0].mxu0
    %v1185 = vadd.f32 %v1080, %v1184
    %v1186 = vpop.f32.mrb[0].mxu0
    %1187 = vmatprep.mubr.f32.mxu0 %v385
    %1188 = vmatmul.mubr.f32.gmra.mrb[0].mxu0 %v384
    %v1189 = vpop.f32.mrb[0].mxu0
    %v1190 = vadd.f32 %v1085, %v1189
    %v1191 = vpop.f32.mrb[0].mxu0
    %1192 = vmatprep.mubr.f32.mxu0 %v390
    %1193 = vmatmul.mubr.f32.gmra.mrb[0].mxu0 %v389
    %v1194 = vpop.f32.mrb[0].mxu0
    %v1195 = vadd.f32 %v1090, %v1194
    %v1196 = vpop.f32.mrb[0].mxu0
    %1197 = vmatprep.mubr.f32.mxu0 %v395
    %1198 = vmatmul.mubr.f32.gmra.mrb[0].mxu0 %v394
    %v1199 = vpop.f32.mrb[0].mxu0
    %v1200 = vadd.f32 %v1095, %v1199
    %v1201 = vpop.f32.mrb[0].mxu0
    %1202 = vmatprep.mubr.f32.mxu0 %v400
    %1203 = vmatmul.mubr.f32.gmra.mrb[0].mxu0 %v399
    %v1204 = vpop.f32.mrb[0].mxu0
    %v1205 = vadd.f32 %v1100, %v1204
    %v1206 = vpop.f32.mrb[0].mxu0
    %1207 = vmatprep.mubr.f32.mxu0 %v405
    %1208 = vmatmul.mubr.f32.gmra.mrb[0].mxu0 %v404
    %v1209 = vpop.f32.mrb[0].mxu0
    %v1210 = vadd.f32 %v1105, %v1209
    %v1211 = vpop.f32.mrb[0].mxu0
    %1212 = vdwg.mxu0
    %1213 = vmatprep.subr.mxu0 0.0
    %1214 = vmatpush1.msra.mxu0 %v601
    %1215 = vmatprep.subr.mxu0 0.0
    %1216 = vmatpush1.msra.mxu0 %v604
    %1217 = vmatprep.subr.mxu0 0.0
    %1218 = vmatpush1.msra.mxu0 %v607
    %1219 = vmatprep.subr.mxu0 0.0
    %1220 = vmatpush1.msra.mxu0 %v610
    %1221 = vmatprep.subr.mxu0 0.0
    %1222 = vmatpush1.msra.mxu0 %v613
    %1223 = vmatprep.subr.mxu0 0.0
    %1224 = vmatpush1.msra.mxu0 %v616
    %1225 = vmatprep.subr.mxu0 0.0
    %1226 = vmatpush1.msra.mxu0 %v619
    %1227 = vmatprep.subr.mxu0 0.0
    %1228 = vmatpush1.msra.mxu0 %v622
    %1229 = vmatprep.subr.mxu0 0.0
    %1230 = vmatpush1.msra.mxu0 %v625
    %1231 = vmatprep.subr.mxu0 0.0
    %1232 = vmatpush1.msra.mxu0 %v628
    %1233 = vmatprep.subr.mxu0 0.0
    %1234 = vmatpush1.msra.mxu0 %v631
    %1235 = vmatprep.subr.mxu0 0.0
    %1236 = vmatpush1.msra.mxu0 %v634
    %1237 = vmatprep.subr.mxu0 0.0
    %1238 = vmatpush1.msra.mxu0 %v637
    %1239 = vmatprep.subr.mxu0 0.0
    %1240 = vmatpush1.msra.mxu0 %v640
    %1241 = vmatprep.subr.mxu0 0.0
    %1242 = vmatpush1.msra.mxu0 %v643
    %1243 = vmatprep.subr.mxu0 0.0
    %1244 = vmatpush1.msra.mxu0 %v646
    %1245 = vmatprep.subr.mxu0 0.0
    %1246 = vmatpush1.msra.mxu0 0.0
    %1247 = vmatprep.subr.mxu0 0.0
    %1248 = vmatpush1.msra.mxu0 0.0
    %1249 = vmatprep.subr.mxu0 0.0
    %1250 = vmatpush1.msra.mxu0 0.0
    %1251 = vmatprep.subr.mxu0 0.0
    %1252 = vmatpush1.msra.mxu0 0.0
    %1253 = vmatprep.subr.mxu0 0.0
    %1254 = vmatpush1.msra.mxu0 0.0
    %1255 = vmatprep.subr.mxu0 0.0
    %1256 = vmatpush1.msra.mxu0 0.0
    %1257 = vmatprep.subr.mxu0 0.0
    %1258 = vmatpush1.msra.mxu0 0.0
    %1259 = vmatprep.subr.mxu0 0.0
    %1260 = vmatpush1.msra.mxu0 0.0
    %1261 = vmatprep.subr.mxu0 0.0
    %1262 = vmatpush1.msra.mxu0 0.0
    %1263 = vmatprep.subr.mxu0 0.0
    %1264 = vmatpush1.msra.mxu0 0.0
    %1265 = vmatprep.subr.mxu0 0.0
    %1266 = vmatpush1.msra.mxu0 0.0
    %1267 = vmatprep.subr.mxu0 0.0
    %1268 = vmatpush1.msra.mxu0 0.0
    %1269 = vmatprep.subr.mxu0 0.0
    %1270 = vmatpush1.msra.mxu0 0.0
    %1271 = vmatprep.subr.mxu0 0.0
    %1272 = vmatpush1.msra.mxu0 0.0
    %1273 = vmatprep.subr.mxu0 0.0
    %1274 = vmatpush1.msra.mxu0 0.0
    %1275 = vmatprep.subr.mxu0 0.0
    %1276 = vmatpush1.msra.mxu0 0.0
    %1277 = vmatprep.mubr.f32.mxu0 0.0
    %1278 = vmatmul.mubr.f32.gmra.mrb[0].mxu0 %v371
    %v1279 = vpop.f32.mrb[0].mxu0
    %v1280 = vadd.f32 %v1175, %v1279
    %v1281 = vpop.f32.mrb[0].mxu0
    %1282 = vmatprep.mubr.f32.mxu0 0.0
    %1283 = vmatmul.mubr.f32.gmra.mrb[0].mxu0 %v376
    %v1284 = vpop.f32.mrb[0].mxu0
    %v1285 = vadd.f32 %v1180, %v1284
    %v1286 = vpop.f32.mrb[0].mxu0
    %1287 = vmatprep.mubr.f32.mxu0 0.0
    %1288 = vmatmul.mubr.f32.gmra.mrb[0].mxu0 %v381
    %v1289 = vpop.f32.mrb[0].mxu0
    %v1290 = vadd.f32 %v1185, %v1289
    %v1291 = vpop.f32.mrb[0].mxu0
    %1292 = vmatprep.mubr.f32.mxu0 0.0
    %1293 = vmatmul.mubr.f32.gmra.mrb[0].mxu0 %v386
    %v1294 = vpop.f32.mrb[0].mxu0
    %v1295 = vadd.f32 %v1190, %v1294
    %v1296 = vpop.f32.mrb[0].mxu0
    %1297 = vmatprep.mubr.f32.mxu0 0.0
    %1298 = vmatmul.mubr.f32.gmra.mrb[0].mxu0 %v391
    %v1299 = vpop.f32.mrb[0].mxu0
    %v1300 = vadd.f32 %v1195, %v1299
    %v1301 = vpop.f32.mrb[0].mxu0
    %1302 = vmatprep.mubr.f32.mxu0 0.0
    %1303 = vmatmul.mubr.f32.gmra.mrb[0].mxu0 %v396
    %v1304 = vpop.f32.mrb[0].mxu0
    %v1305 = vadd.f32 %v1200, %v1304
    %v1306 = vpop.f32.mrb[0].mxu0
    %1307 = vmatprep.mubr.f32.mxu0 0.0
    %1308 = vmatmul.mubr.f32.gmra.mrb[0].mxu0 %v401
    %v1309 = vpop.f32.mrb[0].mxu0
    %v1310 = vadd.f32 %v1205, %v1309
    %v1311 = vpop.f32.mrb[0].mxu0
    %1312 = vmatprep.mubr.f32.mxu0 0.0
    %1313 = vmatmul.mubr.f32.gmra.mrb[0].mxu0 %v406
    %v1314 = vpop.f32.mrb[0].mxu0
    %v1315 = vadd.f32 %v1210, %v1314
    %v1316 = vpop.f32.mrb[0].mxu0
    %1317 = vdwg.mxu0
    %v1318 = vmax.f32 %v957, 0.0
    %v1319 = vmax.f32 %v959, 0.0
    %v1320 = vmax.f32 %v1280, 0.0
    %v1321 = vmax.f32 %v963, 0.0
    %v1322 = vmax.f32 %v965, 0.0
    %v1323 = vmax.f32 %v1285, 0.0
    %v1324 = vmax.f32 %v969, 0.0
    %v1325 = vmax.f32 %v971, 0.0
    %v1326 = vmax.f32 %v1290, 0.0
    %v1327 = vmax.f32 %v975, 0.0
    %v1328 = vmax.f32 %v977, 0.0
    %v1329 = vmax.f32 %v1295, 0.0
    %v1330 = vmax.f32 %v981, 0.0
    %v1331 = vmax.f32 %v983, 0.0
    %v1332 = vmax.f32 %v1300, 0.0
    %v1333 = vmax.f32 %v987, 0.0
    %v1334 = vmax.f32 %v989, 0.0
    %v1335 = vmax.f32 %v1305, 0.0
    %v1336 = vmax.f32 %v993, 0.0
    %v1337 = vmax.f32 %v995, 0.0
    %v1338 = vmax.f32 %v1310, 0.0
    %v1339 = vmax.f32 %v999, 0.0
    %v1340 = vmax.f32 %v1001, 0.0
    %v1341 = vmax.f32 %v1315, 0.0
    %v1342 = vld [vmem:[#allocation10] sm:$0xff]
    %v1343 = vld [vmem:[#allocation10 + $0x8] sm:$0xff]
    %v1344 = vld [vmem:[#allocation10 + $0x10] sm:$0xff]
    %v1345 = vld [vmem:[#allocation10 + $0x18] sm:$0xff]
    %v1346 = vld [vmem:[#allocation10 + $0x20] sm:$0xff]
    %v1347 = vld [vmem:[#allocation10 + $0x28] sm:$0xff]
    %v1348 = vld [vmem:[#allocation10 + $0x30] sm:$0xff]
    %v1349 = vld [vmem:[#allocation10 + $0x38] sm:$0xff]
    %v1350 = vld [vmem:[#allocation10 + $0x40] sm:$0xff]
    %v1351 = vld [vmem:[#allocation10 + $0x48] sm:$0xff]
    %v1352 = vld [vmem:[#allocation10 + $0x50] sm:$0xff]
    %v1353 = vld [vmem:[#allocation10 + $0x58] sm:$0xff]
    %v1354 = vmul.f32 %v1318, %v1342
    %v1355 = vmul.f32 %v1319, %v1343
    %v1356 = vmul.f32 %v1320, %v1344
    %v1357 = vmul.f32 %v1321, %v1345
    %v1358 = vmul.f32 %v1322, %v1346
    %v1359 = vmul.f32 %v1323, %v1347
    %v1360 = vmul.f32 %v1324, %v1348
    %v1361 = vmul.f32 %v1325, %v1349
    %v1362 = vmul.f32 %v1326, %v1350
    %v1363 = vmul.f32 %v1327, %v1351
    %v1364 = vmul.f32 %v1328, %v1352
    %v1365 = vmul.f32 %v1329, %v1353
    %v1366 = vmul.f32 %v1330, %v1342
    %v1367 = vmul.f32 %v1331, %v1343
    %v1368 = vmul.f32 %v1332, %v1344
    %v1369 = vmul.f32 %v1333, %v1345
    %v1370 = vmul.f32 %v1334, %v1346
    %v1371 = vmul.f32 %v1335, %v1347
    %v1372 = vmul.f32 %v1336, %v1348
    %v1373 = vmul.f32 %v1337, %v1349
    %v1374 = vmul.f32 %v1338, %v1350
    %v1375 = vmul.f32 %v1339, %v1351
    %v1376 = vmul.f32 %v1340, %v1352
    %v1377 = vmul.f32 %v1341, %v1353
    %v1378 = vmax.f32 %v1354, %v1357
    %v1379 = vmax.f32 %v1378, %v1360
    %v1380 = vmax.f32 %v1379, %v1363
    %v1381 = vrot.slane %v1380, 4
    %v1382 = vmax.f32 %v1380, %v1381
    %v1383 = vrot.slane %v1382, 2
    %v1384 = vmax.f32 %v1382, %v1383
    %v1385 = vrot.slane %v1384, 1
    %v1386 = vmax.f32 %v1384, %v1385
    %v1387 = vmax.f32 %v1355, %v1358
    %v1388 = vmax.f32 %v1387, %v1361
    %v1389 = vmax.f32 %v1388, %v1364
    %v1390 = vrot.slane %v1389, 4
    %v1391 = vmax.f32 %v1389, %v1390
    %v1392 = vrot.slane %v1391, 2
    %v1393 = vmax.f32 %v1391, %v1392
    %v1394 = vrot.slane %v1393, 1
    %v1395 = vmax.f32 %v1393, %v1394
    %v1396 = vmax.f32 %v1356, %v1359
    %v1397 = vmax.f32 %v1396, %v1362
    %v1398 = vmax.f32 %v1397, %v1365
    %v1399 = vrot.slane %v1398, 4
    %v1400 = vmax.f32 %v1398, %v1399
    %v1401 = vrot.slane %v1400, 2
    %v1402 = vmax.f32 %v1400, %v1401
    %v1403 = vrot.slane %v1402, 1
    %v1404 = vmax.f32 %v1402, %v1403
    %v1405 = vmax.f32 %v1366, %v1369
    %v1406 = vmax.f32 %v1405, %v1372
    %v1407 = vmax.f32 %v1406, %v1375
    %v1408 = vrot.slane %v1407, 4
    %v1409 = vmax.f32 %v1407, %v1408
    %v1410 = vrot.slane %v1409, 2
    %v1411 = vmax.f32 %v1409, %v1410
    %v1412 = vrot.slane %v1411, 1
    %v1413 = vmax.f32 %v1411, %v1412
    %v1414 = vmax.f32 %v1367, %v1370
    %v1415 = vmax.f32 %v1414, %v1373
    %v1416 = vmax.f32 %v1415, %v1376
    %v1417 = vrot.slane %v1416, 4
    %v1418 = vmax.f32 %v1416, %v1417
    %v1419 = vrot.slane %v1418, 2
    %v1420 = vmax.f32 %v1418, %v1419
    %v1421 = vrot.slane %v1420, 1
    %v1422 = vmax.f32 %v1420, %v1421
    %v1423 = vmax.f32 %v1368, %v1371
    %v1424 = vmax.f32 %v1423, %v1374
    %v1425 = vmax.f32 %v1424, %v1377
    %v1426 = vrot.slane %v1425, 4
    %v1427 = vmax.f32 %v1425, %v1426
    %v1428 = vrot.slane %v1427, 2
    %v1429 = vmax.f32 %v1427, %v1428
    %v1430 = vrot.slane %v1429, 1
    %v1431 = vmax.f32 %v1429, %v1430
    %v1432 = vld [vmem:[#allocation8] sm:$0xff]
    %v1433 = vld [vmem:[#allocation8 + $0x8] sm:$0xff]
    %v1434 = vld [vmem:[#allocation8 + $0x10] sm:$0xff]
    %v1435 = vld [vmem:[#allocation8 + $0x18] sm:$0xff]
    %v1436 = vld [vmem:[#allocation8 + $0x20] sm:$0xff]
    %v1437 = vld [vmem:[#allocation8 + $0x28] sm:$0xff]
    %v1438 = vld [vmem:[#allocation8 + $0x30] sm:$0xff]
    %v1439 = vld [vmem:[#allocation8 + $0x38] sm:$0xff]
    %v1440 = vld [vmem:[#allocation8 + $0x40] sm:$0xff]
    %v1441 = vld [vmem:[#allocation8 + $0x48] sm:$0xff]
    %v1442 = vld [vmem:[#allocation8 + $0x50] sm:$0xff]
    %v1443 = vld [vmem:[#allocation8 + $0x58] sm:$0xff]
    %v1444 = vld [vmem:[#allocation8 + $0x60] sm:$0xff]
    %v1445 = vld [vmem:[#allocation8 + $0x68] sm:$0xff]
    %v1446 = vld [vmem:[#allocation8 + $0x70] sm:$0xff]
    %v1447 = vld [vmem:[#allocation8 + $0x78] sm:$0xff]
    %v1448 = vld [vmem:[#allocation8 + $0x80] sm:$0xff]
    %v1449 = vld [vmem:[#allocation8 + $0x88] sm:$0xff]
    %v1450 = vld [vmem:[#allocation8 + $0x90] sm:$0xff]
    %v1451 = vld [vmem:[#allocation8 + $0x98] sm:$0xff]
    %v1452 = vld [vmem:[#allocation8 + $0xa0] sm:$0xff]
    %v1453 = vld [vmem:[#allocation8 + $0xa8] sm:$0xff]
    %v1454 = vld [vmem:[#allocation8 + $0xb0] sm:$0xff]
    %v1455 = vld [vmem:[#allocation8 + $0xb8] sm:$0xff]
    %v1456 = vld [vmem:[#allocation8 + $0xc0] sm:$0xff]
    %v1457 = vld [vmem:[#allocation8 + $0xc8] sm:$0xff]
    %v1458 = vld [vmem:[#allocation8 + $0xd0] sm:$0xff]
    %v1459 = vld [vmem:[#allocation8 + $0xd8] sm:$0xff]
    %v1460 = vld [vmem:[#allocation8 + $0xe0] sm:$0xff]
    %v1461 = vld [vmem:[#allocation8 + $0xe8] sm:$0xff]
    %v1462 = vld [vmem:[#allocation8 + $0xf0] sm:$0xff]
    %v1463 = vld [vmem:[#allocation8 + $0xf8] sm:$0xff]
    %v1464 = vld [vmem:[#allocation8 + $0x100] sm:$0xff]
    %v1465 = vld [vmem:[#allocation8 + $0x108] sm:$0xff]
    %v1466 = vld [vmem:[#allocation8 + $0x110] sm:$0xff]
    %v1467 = vld [vmem:[#allocation8 + $0x118] sm:$0xff]
    %v1468 = vld [vmem:[#allocation8 + $0x120] sm:$0xff]
    %v1469 = vld [vmem:[#allocation8 + $0x128] sm:$0xff]
    %v1470 = vld [vmem:[#allocation8 + $0x130] sm:$0xff]
    %v1471 = vld [vmem:[#allocation8 + $0x138] sm:$0xff]
    %v1472 = vld [vmem:[#allocation8 + $0x140] sm:$0xff]
    %v1473 = vld [vmem:[#allocation8 + $0x148] sm:$0xff]
    %v1474 = vld [vmem:[#allocation8 + $0x150] sm:$0xff]
    %v1475 = vld [vmem:[#allocation8 + $0x158] sm:$0xff]
    %v1476 = vld [vmem:[#allocation8 + $0x160] sm:$0xff]
    %v1477 = vld [vmem:[#allocation8 + $0x168] sm:$0xff]
    %v1478 = vld [vmem:[#allocation8 + $0x170] sm:$0xff]
    %v1479 = vld [vmem:[#allocation8 + $0x178] sm:$0xff]
    %v1480 = vld [vmem:[%s6] sm:$0x1]
    %v1482 = vlaneseq
    %v1483 = vshrl.u32 %v1482, 7
    %v1484 = vsub.s32 0, %v1483
    %v1485 = vrot.slane %v1480, %v1484
    %vm1493 = vcmask 1041409
    %v1494 = vsel %vm1493, %v1413, %v1386
    %v1495 = vsel %vm1493, %v1422, %v1395
    %v1496 = vsel %vm1493, %v1431, %v1404
    %1500 = vmatprep.subr.mxu0 0.0
    %1501 = vmatpush1.msra.mxu0 %v1432
    %1502 = vmatprep.subr.mxu0 0.0
    %1503 = vmatpush1.msra.mxu0 %v1433
    %1504 = vmatprep.subr.mxu0 0.0
    %1505 = vmatpush1.msra.mxu0 %v1434
    %1506 = vmatprep.subr.mxu0 0.0
    %1507 = vmatpush1.msra.mxu0 %v1435
    %1508 = vmatprep.subr.mxu0 0.0
    %1509 = vmatpush1.msra.mxu0 %v1436
    %1510 = vmatprep.subr.mxu0 0.0
    %1511 = vmatpush1.msra.mxu0 %v1437
    %1512 = vmatprep.subr.mxu0 0.0
    %1513 = vmatpush1.msra.mxu0 %v1438
    %1514 = vmatprep.subr.mxu0 0.0
    %1515 = vmatpush1.msra.mxu0 %v1439
    %1516 = vmatprep.subr.mxu0 0.0
    %1517 = vmatpush1.msra.mxu0 %v1440
    %1518 = vmatprep.subr.mxu0 0.0
    %1519 = vmatpush1.msra.mxu0 %v1441
    %1520 = vmatprep.subr.mxu0 0.0
    %1521 = vmatpush1.msra.mxu0 %v1442
    %1522 = vmatprep.subr.mxu0 0.0
    %1523 = vmatpush1.msra.mxu0 %v1443
    %1524 = vmatprep.subr.mxu0 0.0
    %1525 = vmatpush1.msra.mxu0 %v1444
    %1526 = vmatprep.subr.mxu0 0.0
    %1527 = vmatpush1.msra.mxu0 %v1445
    %1528 = vmatprep.subr.mxu0 0.0
    %1529 = vmatpush1.msra.mxu0 %v1446
    %1530 = vmatprep.subr.mxu0 0.0
    %1531 = vmatpush1.msra.mxu0 %v1447
    %1532 = vmatprep.subr.mxu0 0.0
    %1533 = vmatpush1.msra.mxu0 %v1448
    %1534 = vmatprep.subr.mxu0 0.0
    %1535 = vmatpush1.msra.mxu0 %v1449
    %1536 = vmatprep.subr.mxu0 0.0
    %1537 = vmatpush1.msra.mxu0 %v1450
    %1538 = vmatprep.subr.mxu0 0.0
    %1539 = vmatpush1.msra.mxu0 %v1451
    %1540 = vmatprep.subr.mxu0 0.0
    %1541 = vmatpush1.msra.mxu0 %v1452
    %1542 = vmatprep.subr.mxu0 0.0
    %1543 = vmatpush1.msra.mxu0 %v1453
    %1544 = vmatprep.subr.mxu0 0.0
    %1545 = vmatpush1.msra.mxu0 %v1454
    %1546 = vmatprep.subr.mxu0 0.0
    %1547 = vmatpush1.msra.mxu0 %v1455
    %1548 = vmatprep.subr.mxu0 0.0
    %1549 = vmatpush1.msra.mxu0 %v1456
    %1550 = vmatprep.subr.mxu0 0.0
    %1551 = vmatpush1.msra.mxu0 %v1457
    %1552 = vmatprep.subr.mxu0 0.0
    %1553 = vmatpush1.msra.mxu0 %v1458
    %1554 = vmatprep.subr.mxu0 0.0
    %1555 = vmatpush1.msra.mxu0 %v1459
    %1556 = vmatprep.subr.mxu0 0.0
    %1557 = vmatpush1.msra.mxu0 %v1460
    %1558 = vmatprep.subr.mxu0 0.0
    %1559 = vmatpush1.msra.mxu0 %v1461
    %1560 = vmatprep.subr.mxu0 0.0
    %1561 = vmatpush1.msra.mxu0 %v1462
    %1562 = vmatprep.subr.mxu0 0.0
    %1563 = vmatpush1.msra.mxu0 %v1463
    %1564 = vmatprep.mubr.f32.mxu0 %v1495
    %1565 = vmatmul.mubr.f32.gmra.mrb[0].mxu0 %v1494
    %v1566 = vpop.f32.mrb[0].mxu0
    %v1567 = vadd.f32 %v1485, %v1566
    %v1568 = vpop.f32.mrb[0].mxu0
    %1569 = vdwg.mxu0
    %1570 = vmatprep.subr.mxu0 0.0
    %1571 = vmatpush1.msra.mxu0 %v1464
    %1572 = vmatprep.subr.mxu0 0.0
    %1573 = vmatpush1.msra.mxu0 %v1465
    %1574 = vmatprep.subr.mxu0 0.0
    %1575 = vmatpush1.msra.mxu0 %v1466
    %1576 = vmatprep.subr.mxu0 0.0
    %1577 = vmatpush1.msra.mxu0 %v1467
    %1578 = vmatprep.subr.mxu0 0.0
    %1579 = vmatpush1.msra.mxu0 %v1468
    %1580 = vmatprep.subr.mxu0 0.0
    %1581 = vmatpush1.msra.mxu0 %v1469
    %1582 = vmatprep.subr.mxu0 0.0
    %1583 = vmatpush1.msra.mxu0 %v1470
    %1584 = vmatprep.subr.mxu0 0.0
    %1585 = vmatpush1.msra.mxu0 %v1471
    %1586 = vmatprep.subr.mxu0 0.0
    %1587 = vmatpush1.msra.mxu0 %v1472
    %1588 = vmatprep.subr.mxu0 0.0
    %1589 = vmatpush1.msra.mxu0 %v1473
    %1590 = vmatprep.subr.mxu0 0.0
    %1591 = vmatpush1.msra.mxu0 %v1474
    %1592 = vmatprep.subr.mxu0 0.0
    %1593 = vmatpush1.msra.mxu0 %v1475
    %1594 = vmatprep.subr.mxu0 0.0
    %1595 = vmatpush1.msra.mxu0 %v1476
    %1596 = vmatprep.subr.mxu0 0.0
    %1597 = vmatpush1.msra.mxu0 %v1477
    %1598 = vmatprep.subr.mxu0 0.0
    %1599 = vmatpush1.msra.mxu0 %v1478
    %1600 = vmatprep.subr.mxu0 0.0
    %1601 = vmatpush1.msra.mxu0 %v1479
    %1602 = vmatprep.subr.mxu0 0.0
    %1603 = vmatpush1.msra.mxu0 0.0
    %1604 = vmatprep.subr.mxu0 0.0
    %1605 = vmatpush1.msra.mxu0 0.0
    %1606 = vmatprep.subr.mxu0 0.0
    %1607 = vmatpush1.msra.mxu0 0.0
    %1608 = vmatprep.subr.mxu0 0.0
    %1609 = vmatpush1.msra.mxu0 0.0
    %1610 = vmatprep.subr.mxu0 0.0
    %1611 = vmatpush1.msra.mxu0 0.0
    %1612 = vmatprep.subr.mxu0 0.0
    %1613 = vmatpush1.msra.mxu0 0.0
    %1614 = vmatprep.subr.mxu0 0.0
    %1615 = vmatpush1.msra.mxu0 0.0
    %1616 = vmatprep.subr.mxu0 0.0
    %1617 = vmatpush1.msra.mxu0 0.0
    %1618 = vmatprep.subr.mxu0 0.0
    %1619 = vmatpush1.msra.mxu0 0.0
    %1620 = vmatprep.subr.mxu0 0.0
    %1621 = vmatpush1.msra.mxu0 0.0
    %1622 = vmatprep.subr.mxu0 0.0
    %1623 = vmatpush1.msra.mxu0 0.0
    %1624 = vmatprep.subr.mxu0 0.0
    %1625 = vmatpush1.msra.mxu0 0.0
    %1626 = vmatprep.subr.mxu0 0.0
    %1627 = vmatpush1.msra.mxu0 0.0
    %1628 = vmatprep.subr.mxu0 0.0
    %1629 = vmatpush1.msra.mxu0 0.0
    %1630 = vmatprep.subr.mxu0 0.0
    %1631 = vmatpush1.msra.mxu0 0.0
    %1632 = vmatprep.subr.mxu0 0.0
    %1633 = vmatpush1.msra.mxu0 0.0
    %1634 = vmatprep.mubr.f32.mxu0 0.0
    %1635 = vmatmul.mubr.f32.gmra.mrb[0].mxu0 %v1496
    %v1636 = vpop.f32.mrb[0].mxu0
    %v1637 = vadd.f32 %v1567, %v1636
    %v1638 = vpop.f32.mrb[0].mxu0
    %1639 = vdwg.mxu0
    %1640 = vst [vmem:[%s8] sm:$0x3] %v1637
    // Predicated region
    $region54: #{el_cnn_forward.1} parent=1 // pred_check
      _
    $region55: #{el_cnn_forward.1} parent=1 // pred_check_branch
      %1642 = sbr.rel (0) target = $region57
    $region56: #{el_cnn_forward.1} parent=1 // pred_region
      _
    $region57: #{el_cnn_forward.1} parent=1 // pred_fallthru
      _
    // Predicated region
    $region58: #{el_cnn_forward.1} parent=1 // pred_check
      _
    $region59: #{el_cnn_forward.1} parent=1 // pred_check_branch
      %1644 = sbr.rel (0) target = $region61
    $region60: #{el_cnn_forward.1} parent=1 // pred_region
      _
    $region61: #{el_cnn_forward.1} parent=1 // pred_fallthru
      _
    %1645 = vsyncpa [#allocation4], 1
    %1646 = vsyncpa [#allocation6], 1
    %1647 = vsyncpa [#allocation9], 1

</llo_original>
